<compile_context>
chip_gen: v7x
topology: tpu7x:2x2x1
jax: 0.10.0
libtpu: 0.0.40
codegen_flags: <defaults>
</compile_context>

<pallas_src>
import jax
import jax.numpy as jnp
from jax.experimental import pallas as pl
from jax.experimental.pallas import tpu as pltpu


def autopad(k, p=None, d=1):
    """Pad to 'same' shape outputs (mirror of the PyTorch helper)."""
    if d > 1:
        k = d * (k - 1) + 1 if isinstance(k, int) else [d * (x - 1) + 1 for x in k]
    if p is None:
        p = k // 2 if isinstance(k, int) else [x // 2 for x in k]
    return p


def _round_up(x, m):
    return ((x + m - 1) // m) * m


# ---------------------------------------------------------------------------
# Kernel 1: K-tiled conv GEMM (bf16 operands, f32 VMEM accumulator) + per-tile
# BN statistics (sum, sum of squares) emitted at the last K step.
# ---------------------------------------------------------------------------
def _conv_stats_kernel(a_ref, b_ref, conv_ref, sum_ref, ssq_ref, acc_ref):
    # a_ref:    (TM, TK)    bf16 im2col rows for this (m, k) tile
    # b_ref:    (TK, Cb)    bf16 folded weight, Cout zero-padded to lane-dense Cb
    # conv_ref: (TM, C2p)   bf16 conv output tile (C2p = C2 rounded to 8 or 128)
    # sum_ref:  (1, 1, C2p) f32 per-channel sum for this m tile
    # ssq_ref:  (1, 1, C2p) f32 per-channel sum of squares for this m tile
    # acc_ref:  (TM, Cb)    f32 accumulator scratch (resident across the K axis)
    kk = pl.program_id(1)

    @pl.when(kk == 0)
    def _():
        acc_ref[...] = jnp.zeros_like(acc_ref)

    acc_ref[...] += jnp.dot(a_ref[...], b_ref[...],
                            preferred_element_type=jnp.float32)

    @pl.when(kk == pl.num_programs(1) - 1)
    def _():
        c2p = conv_ref.shape[1]
        acc = acc_ref[...][:, :c2p]                      # drop MXU lane padding
        conv_ref[...] = acc.astype(conv_ref.dtype)       # bf16 intermediate
        sum_ref[...] = jnp.sum(acc, axis=0, keepdims=True)[None]
        ssq_ref[...] = jnp.sum(acc * acc, axis=0, keepdims=True)[None]


# ---------------------------------------------------------------------------
# Kernel 2: fused BN affine (pre-folded per-channel scale/shift) + SiLU.
# ---------------------------------------------------------------------------
def _bn_silu_kernel(conv_ref, scale_ref, shift_ref, out_ref):
    y = conv_ref[...].astype(jnp.float32) * scale_ref[...] + shift_ref[...]
    out_ref[...] = (y * jax.nn.sigmoid(y)).astype(out_ref.dtype)


def conv_bn_silu(x_nchw, weight_oihw, gamma, beta, *, k=3, s=1, p=None, d=1,
                 eps=1e-5, tile_m=512, tile_k=512, nchw_out=True):
    """Wrapper: NCHW in / NCHW out (set nchw_out=False to skip the final
    transpose and return NHWC). Matches Conv.forward (groups=1, bias=False)."""
    N, C1, H, W = x_nchw.shape
    C2, _, KH, KW = weight_oihw.shape
    pad = autopad(k, p, d)
    Ho = (H + 2 * pad - d * (KH - 1) - 1) // s + 1
    Wo = (W + 2 * pad - d * (KW - 1) - 1) // s + 1

    LANE, SUB = 128, 8
    K = KH * KW * C1                 # folded MXU contraction dim
    M = N * Ho * Wo

    # MXU RHS stays lane-dense (pad to 128); intermediates / output only pad the
    # channel axis to a sublane multiple when C2 < 128 (cuts their HBM bytes).
    Cb = _round_up(C2, LANE)
    C2p = _round_up(C2, LANE) if C2 >= LANE else _round_up(C2, SUB)

    # K padded to a lane multiple and tiled along an "arbitrary" grid axis.
    Kp = _round_up(K, LANE)
    tile_k = min(_round_up(tile_k, LANE), Kp)
    Kp = _round_up(Kp, tile_k)
    num_k = Kp // tile_k

    tile_m = min(_round_up(tile_m, LANE), _round_up(M, LANE))
    Mp = _round_up(M, tile_m)
    num_m = Mp // tile_m

    # ---- wrapper glue: layout change, spatial zero-pad, im2col, padding ----
    # TODO(synk): for big stride-1 high-res layers, replace this im2col with an
    # in-kernel tap loop to avoid the KH*KW-times HBM copy of the input.
    x_nhwc = jnp.transpose(x_nchw, (0, 2, 3, 1))
    x_pad = jnp.pad(x_nhwc, ((0, 0), (pad, pad), (pad, pad), (0, 0)))
    taps = []
    for kh in range(KH):
        for kw in range(KW):
            h0, w0 = kh * d, kw * d
            taps.append(x_pad[:, h0:h0 + (Ho - 1) * s + 1:s,
                              w0:w0 + (Wo - 1) * s + 1:s, :])
    a = jnp.concatenate(taps, axis=-1).reshape(M, K)
    a = jnp.pad(a, ((0, Mp - M), (0, Kp - K))).astype(jnp.bfloat16)

    w_hwio = jnp.transpose(weight_oihw, (2, 3, 1, 0)).reshape(K, C2)
    b = jnp.pad(w_hwio, ((0, Kp - K), (0, Cb - C2))).astype(jnp.bfloat16)

    # ---- kernel 1: tiled conv GEMM + per-tile statistics ----
    cost1 = pl.CostEstimate(
        flops=2 * Mp * Kp * Cb,
        transcendentals=0,
        bytes_accessed=2 * (Mp * Kp + num_m * Kp * Cb + Mp * C2p)
                       + 4 * (2 * num_m * C2p))
    conv_flat, tile_sum, tile_ssq = pl.pallas_call(
        _conv_stats_kernel,
        out_shape=(jax.ShapeDtypeStruct((Mp, C2p), jnp.bfloat16),
                   jax.ShapeDtypeStruct((num_m, 1, C2p), jnp.float32),
                   jax.ShapeDtypeStruct((num_m, 1, C2p), jnp.float32)),
        grid=(num_m, num_k),
        in_specs=[pl.BlockSpec((tile_m, tile_k), lambda i, kk: (i, kk)),
                  pl.BlockSpec((tile_k, Cb), lambda i, kk: (kk, 0))],
        out_specs=(pl.BlockSpec((tile_m, C2p), lambda i, kk: (i, 0)),
                   pl.BlockSpec((1, 1, C2p), lambda i, kk: (i, 0, 0)),
                   pl.BlockSpec((1, 1, C2p), lambda i, kk: (i, 0, 0))),
        scratch_shapes=[pltpu.VMEM((tile_m, Cb), jnp.float32)],
        compiler_params=pltpu.CompilerParams(
            dimension_semantics=("parallel", "arbitrary"),
            vmem_limit_bytes=64 * 1024 * 1024),
        cost_estimate=cost1,
    )(a, b)

    # ---- tiny cross-tile reduction + BN parameter folding (XLA glue) ----
    # Padded rows/channels are all-zero so they do not perturb the sums.
    total = jnp.sum(tile_sum[:, 0, :], axis=0)             # (C2p,)
    total_sq = jnp.sum(tile_ssq[:, 0, :], axis=0)           # (C2p,)
    mean = total / M
    # One-pass variance can go slightly negative from f32 cancellation -> clamp.
    var = jnp.maximum(total_sq / M - mean * mean, 0.0)      # biased (training BN)
    gamma_p = jnp.pad(gamma.astype(jnp.float32), (0, C2p - C2), constant_values=1.0)
    beta_p = jnp.pad(beta.astype(jnp.float32), (0, C2p - C2))
    scale = (gamma_p * jax.lax.rsqrt(var + eps)).reshape(1, C2p)
    shift = (beta_p - mean * scale[0]).reshape(1, C2p)

    # ---- kernel 2: BN affine + SiLU epilogue (bf16 in, f32 out) ----
    cost2 = pl.CostEstimate(
        flops=4 * Mp * C2p,
        transcendentals=Mp * C2p,
        bytes_accessed=2 * Mp * C2p + 4 * Mp * C2p + 4 * 2 * C2p)
    out_flat = pl.pallas_call(
        _bn_silu_kernel,
        out_shape=jax.ShapeDtypeStruct((Mp, C2p), jnp.float32),
        grid=(num_m,),
        in_specs=[pl.BlockSpec((tile_m, C2p), lambda i: (i, 0)),
                  pl.BlockSpec((1, C2p), lambda i: (0, 0)),
                  pl.BlockSpec((1, C2p), lambda i: (0, 0))],
        out_specs=pl.BlockSpec((tile_m, C2p), lambda i: (i, 0)),
        compiler_params=pltpu.CompilerParams(
            dimension_semantics=("parallel",),
            vmem_limit_bytes=64 * 1024 * 1024),
        cost_estimate=cost2,
    )(conv_flat, scale, shift)

    out_nhwc = out_flat[:M, :C2].reshape(N, Ho, Wo, C2)
    if nchw_out:
        return jnp.transpose(out_nhwc, (0, 3, 1, 2))        # match module layout
    return out_nhwc


if __name__ == "__main__":
    key = jax.random.PRNGKey(0)
    kx, kw = jax.random.split(key)

    # Module config: Conv(c1=4, c2=8, k=3, s=1) -> autopad gives 'same' padding.
    N, C1, H, W = 2, 4, 16, 16
    C2, Kk = 8, 3
    eps = 1e-5

    x = jax.random.normal(kx, (N, C1, H, W), dtype=jnp.float32)
    # nn.Conv2d weight shape (c2, c1/g, k, k), bias=False; deterministic init.
    conv_weight = 0.1 * jax.random.normal(kw, (C2, C1, Kk, Kk), dtype=jnp.float32)
    # nn.BatchNorm2d default init: weight=1, bias=0, eps=1e-5.
    bn_gamma = jnp.ones((C2,), dtype=jnp.float32)
    bn_beta = jnp.zeros((C2,), dtype=jnp.float32)

    out = conv_bn_silu(x, conv_weight, bn_gamma, bn_beta, k=Kk, s=1, eps=eps)
    out = jax.block_until_ready(out)
    assert out.shape == (N, C2, H, W), out.shape

    # Pure-XLA f32 reference of the same forward semantics (training-mode BN).
    ref_conv = jax.lax.conv_general_dilated(
        x, conv_weight, window_strides=(1, 1), padding=[(1, 1), (1, 1)],
        dimension_numbers=("NCHW", "OIHW", "NCHW"))
    mu = ref_conv.mean(axis=(0, 2, 3), keepdims=True)
    va = ((ref_conv - mu) ** 2).mean(axis=(0, 2, 3), keepdims=True)
    yr = (ref_conv - mu) * jax.lax.rsqrt(va + eps)
    yr = yr * bn_gamma.reshape(1, C2, 1, 1) + bn_beta.reshape(1, C2, 1, 1)
    ref = yr * jax.nn.sigmoid(yr)
    # Tolerance loosened for the bf16 MXU operands + bf16 conv intermediate.
    max_err = float(jnp.abs(out - ref).max())
    assert jnp.allclose(out, ref, atol=6e-2, rtol=6e-2), max_err

    print("KERNEL_OK")
</pallas_src>

<mosaic_0001>
module attributes {stable_mosaic.version = 11 : i64} {
  func.func @_conv_stats_kernel(%arg0: i32, %arg1: i32, %arg2: memref<512x128xbf16, #tpu.memory_space<vmem>>, %arg3: memref<128x128xbf16, #tpu.memory_space<vmem>>, %arg4: memref<512x8xbf16, #tpu.memory_space<vmem>>, %arg5: memref<1x1x8xf32, #tpu.memory_space<vmem>>, %arg6: memref<1x1x8xf32, #tpu.memory_space<vmem>>, %arg7: memref<512x128xf32, #tpu.memory_space<vmem>>) attributes {dimension_semantics = [#tpu.dimension_semantics<parallel>, #tpu.dimension_semantics<arbitrary>], iteration_bounds = array<i64: 1, 1>, scalar_prefetch = 0 : i64, scratch_operands = 1 : i64, tpu.core_type = #tpu.core_type<tc>, window_params = [{transform_indices = @transform_0, window_bounds = array<i64: 512, 128>}, {transform_indices = @transform_1, window_bounds = array<i64: 128, 128>}, {transform_indices = @transform_2, window_bounds = array<i64: 512, 8>}, {transform_indices = @transform_3, window_bounds = array<i64: 1, 1, 8>}, {transform_indices = @transform_4, window_bounds = array<i64: 1, 1, 8>}]} {
    %c0_i32 = arith.constant 0 : i32
    %0 = arith.cmpi eq, %arg1, %c0_i32 : i32
    %1 = arith.extui %0 : i1 to i32
    %c0_i32_0 = arith.constant 0 : i32
    %2 = arith.cmpi ne, %1, %c0_i32_0 : i32
    scf.if %2 {
      %cst_10 = arith.constant 0.000000e+00 : f32
      %12 = vector.broadcast %cst_10 : f32 to vector<512x128xf32>
      %c0_11 = arith.constant 0 : index
      %c0_12 = arith.constant 0 : index
      %13 = vector.load %arg7[%c0_11, %c0_12] : memref<512x128xf32, #tpu.memory_space<vmem>>, vector<512x128xf32>
      tpu.vector_store %arg7[%c0_11, %c0_12], %12 {strides = array<i32>} : memref<512x128xf32, #tpu.memory_space<vmem>>, vector<512x128xf32>,
    } else {
    }
    %c0 = arith.constant 0 : index
    %c0_1 = arith.constant 0 : index
    %3 = vector.load %arg7[%c0, %c0_1] : memref<512x128xf32, #tpu.memory_space<vmem>>, vector<512x128xf32>
    %c0_2 = arith.constant 0 : index
    %c0_3 = arith.constant 0 : index
    %4 = vector.load %arg2[%c0_2, %c0_3] : memref<512x128xbf16, #tpu.memory_space<vmem>>, vector<512x128xbf16>
    %c0_4 = arith.constant 0 : index
    %c0_5 = arith.constant 0 : index
    %5 = vector.load %arg3[%c0_4, %c0_5] : memref<128x128xbf16, #tpu.memory_space<vmem>>, vector<128x128xbf16>
    %cst = arith.constant dense<0.000000e+00> : vector<512x128xf32>
    %6 = tpu.matmul %4, %5, %cst {dimension_numbers = #tpu.dot_dimension_numbers<[1], [0], [0], [1], [0, 0, 1, 1], [], []>} : vector<512x128xbf16>, vector<128x128xbf16>, vector<512x128xf32> -> vector<512x128xf32>
    %7 = arith.addf %3, %6 : vector<512x128xf32>
    %c0_6 = arith.constant 0 : index
    %c0_7 = arith.constant 0 : index
    %8 = vector.load %arg7[%c0_6, %c0_7] : memref<512x128xf32, #tpu.memory_space<vmem>>, vector<512x128xf32>
    tpu.vector_store %arg7[%c0_6, %c0_7], %7 {strides = array<i32>} : memref<512x128xf32, #tpu.memory_space<vmem>>, vector<512x128xf32>,
    %c0_i32_8 = arith.constant 0 : i32
    %9 = arith.cmpi eq, %arg1, %c0_i32_8 : i32
    %10 = arith.extui %9 : i1 to i32
    %c0_i32_9 = arith.constant 0 : i32
    %11 = arith.cmpi ne, %10, %c0_i32_9 : i32
    scf.if %11 {
      %c0_10 = arith.constant 0 : index
      %c0_11 = arith.constant 0 : index
      %12 = vector.load %arg7[%c0_10, %c0_11] : memref<512x128xf32, #tpu.memory_space<vmem>>, vector<512x128xf32>
      %13 = vector.extract_strided_slice %12 {offsets = [0, 0], sizes = [512, 8], strides = [1, 1]} : vector<512x128xf32> to vector<512x8xf32>
      %14 = arith.truncf %13 : vector<512x8xf32> to vector<512x8xbf16>
      %c0_12 = arith.constant 0 : index
      %c0_13 = arith.constant 0 : index
      %15 = vector.load %arg4[%c0_12, %c0_13] : memref<512x8xbf16, #tpu.memory_space<vmem>>, vector<512x8xbf16>
      tpu.vector_store %arg4[%c0_12, %c0_13], %14 {strides = array<i32>} : memref<512x8xbf16, #tpu.memory_space<vmem>>, vector<512x8xbf16>,
      %cst_14 = arith.constant dense<0.000000e+00> : vector<8xf32>
      %16 = vector.multi_reduction <add>, %13, %cst_14 [0] : vector<512x8xf32> to vector<8xf32>
      %17 = vector.shape_cast %16 : vector<8xf32> to vector<1x8xf32>
      %18 = vector.shape_cast %17 : vector<1x8xf32> to vector<1x1x8xf32>
      %c0_15 = arith.constant 0 : index
      %c0_16 = arith.constant 0 : index
      %c0_17 = arith.constant 0 : index
      %19 = vector.load %arg5[%c0_15, %c0_16, %c0_17] : memref<1x1x8xf32, #tpu.memory_space<vmem>>, vector<1x1x8xf32>
      tpu.vector_store %arg5[%c0_15, %c0_16, %c0_17], %18 {strides = array<i32>} : memref<1x1x8xf32, #tpu.memory_space<vmem>>, vector<1x1x8xf32>,
      %20 = arith.mulf %13, %13 : vector<512x8xf32>
      %cst_18 = arith.constant dense<0.000000e+00> : vector<8xf32>
      %21 = vector.multi_reduction <add>, %20, %cst_18 [0] : vector<512x8xf32> to vector<8xf32>
      %22 = vector.shape_cast %21 : vector<8xf32> to vector<1x8xf32>
      %23 = vector.shape_cast %22 : vector<1x8xf32> to vector<1x1x8xf32>
      %c0_19 = arith.constant 0 : index
      %c0_20 = arith.constant 0 : index
      %c0_21 = arith.constant 0 : index
      %24 = vector.load %arg6[%c0_19, %c0_20, %c0_21] : memref<1x1x8xf32, #tpu.memory_space<vmem>>, vector<1x1x8xf32>
      tpu.vector_store %arg6[%c0_19, %c0_20, %c0_21], %23 {strides = array<i32>} : memref<1x1x8xf32, #tpu.memory_space<vmem>>, vector<1x1x8xf32>,
    } else {
    }
    return
  }
  func.func @transform_0(%arg0: i32, %arg1: i32) -> (i32, i32) {
    %c0_i32 = arith.constant 0 : i32
    return %arg0, %arg1 : i32, i32
  }
  func.func @transform_1(%arg0: i32, %arg1: i32) -> (i32, i32) {
    %c0_i32 = arith.constant 0 : i32
    %c0_i32_0 = arith.constant 0 : i32
    return %arg1, %c0_i32 : i32, i32
  }
  func.func @transform_2(%arg0: i32, %arg1: i32) -> (i32, i32) {
    %c0_i32 = arith.constant 0 : i32
    %c0_i32_0 = arith.constant 0 : i32
    return %arg0, %c0_i32 : i32, i32
  }
  func.func @transform_3(%arg0: i32, %arg1: i32) -> (i32, i32, i32) {
    %c0_i32 = arith.constant 0 : i32
    %c0_i32_0 = arith.constant 0 : i32
    %c0_i32_1 = arith.constant 0 : i32
    return %arg0, %c0_i32, %c0_i32_0 : i32, i32, i32
  }
  func.func @transform_4(%arg0: i32, %arg1: i32) -> (i32, i32, i32) {
    %c0_i32 = arith.constant 0 : i32
    %c0_i32_0 = arith.constant 0 : i32
    %c0_i32_1 = arith.constant 0 : i32
    return %arg0, %c0_i32, %c0_i32_0 : i32, i32, i32
  }
}

</mosaic_0001>

<llo_original>
// kernel: tpu_custom_call.1
$region0: #{tpu_custom_call.1}
  #allocation0 [shape = 'u32[]', space=smem, size = 0x4, offset = 0x4, fixed_abs, tag = 'smem constant byte address 0x4 - core index']
  #allocation1 [shape = 'u32[144,128]{1,0:T(1,128)}', space=vmem, size = 0x12000, scoped, tag = 'internal scratch']
  #allocation2 [shape = 'f32[512,128]{1,0:T(8,128)}', space=vmem, size = 0x40000, scoped, tag = 'scratch operand']
  %s0 = inlined_call_operand.hbm [shape: bf16[512,128], index: 0, kind: input, shape index: {}]
  %s1 = inlined_call_operand.hbm [shape: bf16[128,128], index: 1, kind: input, shape index: {}]
  %s2 = inlined_call_operand.hbm [shape: bf16[512,8], index: 2, kind: output, shape index: {0}]
  %s3 = inlined_call_operand.hbm [shape: f32[1,1,8], index: 3, kind: output, shape index: {1}]
  %s4 = inlined_call_operand.hbm [shape: f32[1,1,8], index: 4, kind: output, shape index: {2}]
  %5 = xla_tuple %s2, %s3, %s4
  %s6 = sld [smem:[#allocation0]]
  $region50: #{tpu_custom_call.1} parent=0
    _
  %s8 = ssub.s32 1, %s6
  %s9 = scalar_select 0, %s8, %s6
  $region1: #{tpu_custom_call.1} parent=0
    #allocation3 [shape = 'u8[131072]{0}', space=vmem, size = 0x20000, scoped, tag = 'input window, operand 0, single buffered']
    #allocation4 [shape = 's32[1]{0}', space=sflag, size = 0x4, scoped, tag = 'scoped memory for tpu_custom_call.1']
    #allocation5 [shape = 's32[1]{0}', space=sflag, size = 0x4, scoped, tag = 'scoped memory for tpu_custom_call.1']
    #allocation6 [shape = 'u8[32768]{0}', space=vmem, size = 0x8000, scoped, tag = 'input window, operand 1, single buffered']
    #allocation7 [shape = 's32[1]{0}', space=sflag, size = 0x4, scoped, tag = 'scoped memory for tpu_custom_call.1']
    #allocation8 [shape = 'u8[131072]{0}', space=vmem, size = 0x20000, scoped, tag = 'output window, operand 0, single buffered']
    #allocation9 [shape = 'u8[512]{0}', space=vmem, size = 0x400, scoped, tag = 'output window, operand 1, single buffered']
    #allocation10 [shape = 's32[1]{0}', space=sflag, size = 0x4, scoped, tag = 'scoped memory for tpu_custom_call.1']
    #allocation11 [shape = 'u8[512]{0}', space=vmem, size = 0x400, scoped, tag = 'output window, operand 2, single buffered']
    %10 = vsyncpa [#allocation4], 0
    %11 = vsyncpa [#allocation7], 0
    %12 = vsyncpa [#allocation5], 0
    %13 = vsyncpa [#allocation10], 0
    // Predicated region
    $region2: #{tpu_custom_call.1} parent=1 // pred_check
      _
    $region3: #{tpu_custom_call.1} parent=1 // pred_check_branch
      %15 = sbr.rel (0) target = $region5
    $region4: #{tpu_custom_call.1} parent=1 // pred_region
      %s17 = ssub.s32 4096, 4096
      %18 = vsyncadd [#allocation4], %s17
      %s19 = sshll.u32 [#allocation3], 4
      %s20 = int_to_ptr.vmem [resolvable:$true] %s19
      %25 = dma.hbm_to_vmem [thread:$0]  %s0, 4096, %s20, [#allocation4], 64, 64, 4
    $region5: #{tpu_custom_call.1} parent=1 // pred_fallthru
      _
    // Predicated region
    $region6: #{tpu_custom_call.1} parent=1 // pred_check
      _
    $region7: #{tpu_custom_call.1} parent=1 // pred_check_branch
      %27 = sbr.rel (0) target = $region9
    $region8: #{tpu_custom_call.1} parent=1 // pred_region
      %s29 = ssub.s32 1024, 1024
      %30 = vsyncadd [#allocation7], %s29
      %s31 = sshll.u32 [#allocation6], 4
      %s32 = int_to_ptr.vmem [resolvable:$true] %s31
      %37 = dma.hbm_to_vmem [thread:$0]  %s1, 1024, %s32, [#allocation7], 64, 64, 4
    $region9: #{tpu_custom_call.1} parent=1 // pred_fallthru
      _
    // Predicated region
    $region10: #{tpu_custom_call.1} parent=1 // pred_check
      _
    $region11: #{tpu_custom_call.1} parent=1 // pred_check_branch
      %39 = sbr.rel (0) target = $region13
    $region12: #{tpu_custom_call.1} parent=1 // pred_region
      %40 = dma.done [#allocation4], 4096
    $region13: #{tpu_custom_call.1} parent=1 // pred_fallthru
      _
    // Predicated region
    $region14: #{tpu_custom_call.1} parent=1 // pred_check
      _
    $region15: #{tpu_custom_call.1} parent=1 // pred_check_branch
      %42 = sbr.rel (0) target = $region17
    $region16: #{tpu_custom_call.1} parent=1 // pred_region
      %43 = dma.done [#allocation7], 1024
    $region17: #{tpu_custom_call.1} parent=1 // pred_fallthru
      _
    %p45 = scmp.eq.s32.totalorder 0, 0
    // Predicated region
    $region18: #{tpu_custom_call.1} parent=1 // pred_check
      %p46 = pneg %p45
    $region19: #{tpu_custom_call.1} parent=1 // pred_check_branch
      %48 = sbr.rel (%p46) target = $region21
    $region20: #{tpu_custom_call.1} parent=1 // pred_region
      %49 = vst [vmem:[#allocation2] sm:$0xff] 0.0
      %50 = vst [vmem:[#allocation2 + $0x8] sm:$0xff] 0.0
      %51 = vst [vmem:[#allocation2 + $0x10] sm:$0xff] 0.0
      %52 = vst [vmem:[#allocation2 + $0x18] sm:$0xff] 0.0
      %53 = vst [vmem:[#allocation2 + $0x20] sm:$0xff] 0.0
      %54 = vst [vmem:[#allocation2 + $0x28] sm:$0xff] 0.0
      %55 = vst [vmem:[#allocation2 + $0x30] sm:$0xff] 0.0
      %56 = vst [vmem:[#allocation2 + $0x38] sm:$0xff] 0.0
      %57 = vst [vmem:[#allocation2 + $0x40] sm:$0xff] 0.0
      %58 = vst [vmem:[#allocation2 + $0x48] sm:$0xff] 0.0
      %59 = vst [vmem:[#allocation2 + $0x50] sm:$0xff] 0.0
      %60 = vst [vmem:[#allocation2 + $0x58] sm:$0xff] 0.0
      %61 = vst [vmem:[#allocation2 + $0x60] sm:$0xff] 0.0
      %62 = vst [vmem:[#allocation2 + $0x68] sm:$0xff] 0.0
      %63 = vst [vmem:[#allocation2 + $0x70] sm:$0xff] 0.0
      %64 = vst [vmem:[#allocation2 + $0x78] sm:$0xff] 0.0
      %65 = vst [vmem:[#allocation2 + $0x80] sm:$0xff] 0.0
      %66 = vst [vmem:[#allocation2 + $0x88] sm:$0xff] 0.0
      %67 = vst [vmem:[#allocation2 + $0x90] sm:$0xff] 0.0
      %68 = vst [vmem:[#allocation2 + $0x98] sm:$0xff] 0.0
      %69 = vst [vmem:[#allocation2 + $0xa0] sm:$0xff] 0.0
      %70 = vst [vmem:[#allocation2 + $0xa8] sm:$0xff] 0.0
      %71 = vst [vmem:[#allocation2 + $0xb0] sm:$0xff] 0.0
      %72 = vst [vmem:[#allocation2 + $0xb8] sm:$0xff] 0.0
      %73 = vst [vmem:[#allocation2 + $0xc0] sm:$0xff] 0.0
      %74 = vst [vmem:[#allocation2 + $0xc8] sm:$0xff] 0.0
      %75 = vst [vmem:[#allocation2 + $0xd0] sm:$0xff] 0.0
      %76 = vst [vmem:[#allocation2 + $0xd8] sm:$0xff] 0.0
      %77 = vst [vmem:[#allocation2 + $0xe0] sm:$0xff] 0.0
      %78 = vst [vmem:[#allocation2 + $0xe8] sm:$0xff] 0.0
      %79 = vst [vmem:[#allocation2 + $0xf0] sm:$0xff] 0.0
      %80 = vst [vmem:[#allocation2 + $0xf8] sm:$0xff] 0.0
      %81 = vst [vmem:[#allocation2 + $0x100] sm:$0xff] 0.0
      %82 = vst [vmem:[#allocation2 + $0x108] sm:$0xff] 0.0
      %83 = vst [vmem:[#allocation2 + $0x110] sm:$0xff] 0.0
      %84 = vst [vmem:[#allocation2 + $0x118] sm:$0xff] 0.0
      %85 = vst [vmem:[#allocation2 + $0x120] sm:$0xff] 0.0
      %86 = vst [vmem:[#allocation2 + $0x128] sm:$0xff] 0.0
      %87 = vst [vmem:[#allocation2 + $0x130] sm:$0xff] 0.0
      %88 = vst [vmem:[#allocation2 + $0x138] sm:$0xff] 0.0
      %89 = vst [vmem:[#allocation2 + $0x140] sm:$0xff] 0.0
      %90 = vst [vmem:[#allocation2 + $0x148] sm:$0xff] 0.0
      %91 = vst [vmem:[#allocation2 + $0x150] sm:$0xff] 0.0
      %92 = vst [vmem:[#allocation2 + $0x158] sm:$0xff] 0.0
      %93 = vst [vmem:[#allocation2 + $0x160] sm:$0xff] 0.0
      %94 = vst [vmem:[#allocation2 + $0x168] sm:$0xff] 0.0
      %95 = vst [vmem:[#allocation2 + $0x170] sm:$0xff] 0.0
      %96 = vst [vmem:[#allocation2 + $0x178] sm:$0xff] 0.0
      %97 = vst [vmem:[#allocation2 + $0x180] sm:$0xff] 0.0
      %98 = vst [vmem:[#allocation2 + $0x188] sm:$0xff] 0.0
      %99 = vst [vmem:[#allocation2 + $0x190] sm:$0xff] 0.0
      %100 = vst [vmem:[#allocation2 + $0x198] sm:$0xff] 0.0
      %101 = vst [vmem:[#allocation2 + $0x1a0] sm:$0xff] 0.0
      %102 = vst [vmem:[#allocation2 + $0x1a8] sm:$0xff] 0.0
      %103 = vst [vmem:[#allocation2 + $0x1b0] sm:$0xff] 0.0
      %104 = vst [vmem:[#allocation2 + $0x1b8] sm:$0xff] 0.0
      %105 = vst [vmem:[#allocation2 + $0x1c0] sm:$0xff] 0.0
      %106 = vst [vmem:[#allocation2 + $0x1c8] sm:$0xff] 0.0
      %107 = vst [vmem:[#allocation2 + $0x1d0] sm:$0xff] 0.0
      %108 = vst [vmem:[#allocation2 + $0x1d8] sm:$0xff] 0.0
      %109 = vst [vmem:[#allocation2 + $0x1e0] sm:$0xff] 0.0
      %110 = vst [vmem:[#allocation2 + $0x1e8] sm:$0xff] 0.0
      %111 = vst [vmem:[#allocation2 + $0x1f0] sm:$0xff] 0.0
      %112 = vst [vmem:[#allocation2 + $0x1f8] sm:$0xff] 0.0
    $region21: #{tpu_custom_call.1} parent=1 // pred_fallthru
      _
    %v113 = vld [vmem:[#allocation2] sm:$0xff]
    %v114 = vld [vmem:[#allocation2 + $0x8] sm:$0xff]
    %v115 = vld [vmem:[#allocation2 + $0x10] sm:$0xff]
    %v116 = vld [vmem:[#allocation2 + $0x18] sm:$0xff]
    %v117 = vld [vmem:[#allocation2 + $0x20] sm:$0xff]
    %v118 = vld [vmem:[#allocation2 + $0x28] sm:$0xff]
    %v119 = vld [vmem:[#allocation2 + $0x30] sm:$0xff]
    %v120 = vld [vmem:[#allocation2 + $0x38] sm:$0xff]
    %v121 = vld [vmem:[#allocation2 + $0x40] sm:$0xff]
    %v122 = vld [vmem:[#allocation2 + $0x48] sm:$0xff]
    %v123 = vld [vmem:[#allocation2 + $0x50] sm:$0xff]
    %v124 = vld [vmem:[#allocation2 + $0x58] sm:$0xff]
    %v125 = vld [vmem:[#allocation2 + $0x60] sm:$0xff]
    %v126 = vld [vmem:[#allocation2 + $0x68] sm:$0xff]
    %v127 = vld [vmem:[#allocation2 + $0x70] sm:$0xff]
    %v128 = vld [vmem:[#allocation2 + $0x78] sm:$0xff]
    %v129 = vld [vmem:[#allocation2 + $0x80] sm:$0xff]
    %v130 = vld [vmem:[#allocation2 + $0x88] sm:$0xff]
    %v131 = vld [vmem:[#allocation2 + $0x90] sm:$0xff]
    %v132 = vld [vmem:[#allocation2 + $0x98] sm:$0xff]
    %v133 = vld [vmem:[#allocation2 + $0xa0] sm:$0xff]
    %v134 = vld [vmem:[#allocation2 + $0xa8] sm:$0xff]
    %v135 = vld [vmem:[#allocation2 + $0xb0] sm:$0xff]
    %v136 = vld [vmem:[#allocation2 + $0xb8] sm:$0xff]
    %v137 = vld [vmem:[#allocation2 + $0xc0] sm:$0xff]
    %v138 = vld [vmem:[#allocation2 + $0xc8] sm:$0xff]
    %v139 = vld [vmem:[#allocation2 + $0xd0] sm:$0xff]
    %v140 = vld [vmem:[#allocation2 + $0xd8] sm:$0xff]
    %v141 = vld [vmem:[#allocation2 + $0xe0] sm:$0xff]
    %v142 = vld [vmem:[#allocation2 + $0xe8] sm:$0xff]
    %v143 = vld [vmem:[#allocation2 + $0xf0] sm:$0xff]
    %v144 = vld [vmem:[#allocation2 + $0xf8] sm:$0xff]
    %v145 = vld [vmem:[#allocation2 + $0x100] sm:$0xff]
    %v146 = vld [vmem:[#allocation2 + $0x108] sm:$0xff]
    %v147 = vld [vmem:[#allocation2 + $0x110] sm:$0xff]
    %v148 = vld [vmem:[#allocation2 + $0x118] sm:$0xff]
    %v149 = vld [vmem:[#allocation2 + $0x120] sm:$0xff]
    %v150 = vld [vmem:[#allocation2 + $0x128] sm:$0xff]
    %v151 = vld [vmem:[#allocation2 + $0x130] sm:$0xff]
    %v152 = vld [vmem:[#allocation2 + $0x138] sm:$0xff]
    %v153 = vld [vmem:[#allocation2 + $0x140] sm:$0xff]
    %v154 = vld [vmem:[#allocation2 + $0x148] sm:$0xff]
    %v155 = vld [vmem:[#allocation2 + $0x150] sm:$0xff]
    %v156 = vld [vmem:[#allocation2 + $0x158] sm:$0xff]
    %v157 = vld [vmem:[#allocation2 + $0x160] sm:$0xff]
    %v158 = vld [vmem:[#allocation2 + $0x168] sm:$0xff]
    %v159 = vld [vmem:[#allocation2 + $0x170] sm:$0xff]
    %v160 = vld [vmem:[#allocation2 + $0x178] sm:$0xff]
    %v161 = vld [vmem:[#allocation2 + $0x180] sm:$0xff]
    %v162 = vld [vmem:[#allocation2 + $0x188] sm:$0xff]
    %v163 = vld [vmem:[#allocation2 + $0x190] sm:$0xff]
    %v164 = vld [vmem:[#allocation2 + $0x198] sm:$0xff]
    %v165 = vld [vmem:[#allocation2 + $0x1a0] sm:$0xff]
    %v166 = vld [vmem:[#allocation2 + $0x1a8] sm:$0xff]
    %v167 = vld [vmem:[#allocation2 + $0x1b0] sm:$0xff]
    %v168 = vld [vmem:[#allocation2 + $0x1b8] sm:$0xff]
    %v169 = vld [vmem:[#allocation2 + $0x1c0] sm:$0xff]
    %v170 = vld [vmem:[#allocation2 + $0x1c8] sm:$0xff]
    %v171 = vld [vmem:[#allocation2 + $0x1d0] sm:$0xff]
    %v172 = vld [vmem:[#allocation2 + $0x1d8] sm:$0xff]
    %v173 = vld [vmem:[#allocation2 + $0x1e0] sm:$0xff]
    %v174 = vld [vmem:[#allocation2 + $0x1e8] sm:$0xff]
    %v175 = vld [vmem:[#allocation2 + $0x1f0] sm:$0xff]
    %v176 = vld [vmem:[#allocation2 + $0x1f8] sm:$0xff]
    %v177 = vld [vmem:[#allocation3] sm:$0xf]
    %v178 = vld [vmem:[#allocation3 + $0x4] sm:$0xf]
    %v179 = vld [vmem:[#allocation3 + $0x8] sm:$0xf]
    %v180 = vld [vmem:[#allocation3 + $0xc] sm:$0xf]
    %v181 = vld [vmem:[#allocation3 + $0x10] sm:$0xf]
    %v182 = vld [vmem:[#allocation3 + $0x14] sm:$0xf]
    %v183 = vld [vmem:[#allocation3 + $0x18] sm:$0xf]
    %v184 = vld [vmem:[#allocation3 + $0x1c] sm:$0xf]
    %v185 = vld [vmem:[#allocation3 + $0x20] sm:$0xf]
    %v186 = vld [vmem:[#allocation3 + $0x24] sm:$0xf]
    %v187 = vld [vmem:[#allocation3 + $0x28] sm:$0xf]
    %v188 = vld [vmem:[#allocation3 + $0x2c] sm:$0xf]
    %v189 = vld [vmem:[#allocation3 + $0x30] sm:$0xf]
    %v190 = vld [vmem:[#allocation3 + $0x34] sm:$0xf]
    %v191 = vld [vmem:[#allocation3 + $0x38] sm:$0xf]
    %v192 = vld [vmem:[#allocation3 + $0x3c] sm:$0xf]
    %v193 = vld [vmem:[#allocation3 + $0x40] sm:$0xf]
    %v194 = vld [vmem:[#allocation3 + $0x44] sm:$0xf]
    %v195 = vld [vmem:[#allocation3 + $0x48] sm:$0xf]
    %v196 = vld [vmem:[#allocation3 + $0x4c] sm:$0xf]
    %v197 = vld [vmem:[#allocation3 + $0x50] sm:$0xf]
    %v198 = vld [vmem:[#allocation3 + $0x54] sm:$0xf]
    %v199 = vld [vmem:[#allocation3 + $0x58] sm:$0xf]
    %v200 = vld [vmem:[#allocation3 + $0x5c] sm:$0xf]
    %v201 = vld [vmem:[#allocation3 + $0x60] sm:$0xf]
    %v202 = vld [vmem:[#allocation3 + $0x64] sm:$0xf]
    %v203 = vld [vmem:[#allocation3 + $0x68] sm:$0xf]
    %v204 = vld [vmem:[#allocation3 + $0x6c] sm:$0xf]
    %v205 = vld [vmem:[#allocation3 + $0x70] sm:$0xf]
    %v206 = vld [vmem:[#allocation3 + $0x74] sm:$0xf]
    %v207 = vld [vmem:[#allocation3 + $0x78] sm:$0xf]
    %v208 = vld [vmem:[#allocation3 + $0x7c] sm:$0xf]
    %v209 = vld [vmem:[#allocation3 + $0x80] sm:$0xf]
    %v210 = vld [vmem:[#allocation3 + $0x84] sm:$0xf]
    %v211 = vld [vmem:[#allocation3 + $0x88] sm:$0xf]
    %v212 = vld [vmem:[#allocation3 + $0x8c] sm:$0xf]
    %v213 = vld [vmem:[#allocation3 + $0x90] sm:$0xf]
    %v214 = vld [vmem:[#allocation3 + $0x94] sm:$0xf]
    %v215 = vld [vmem:[#allocation3 + $0x98] sm:$0xf]
    %v216 = vld [vmem:[#allocation3 + $0x9c] sm:$0xf]
    %v217 = vld [vmem:[#allocation3 + $0xa0] sm:$0xf]
    %v218 = vld [vmem:[#allocation3 + $0xa4] sm:$0xf]
    %v219 = vld [vmem:[#allocation3 + $0xa8] sm:$0xf]
    %v220 = vld [vmem:[#allocation3 + $0xac] sm:$0xf]
    %v221 = vld [vmem:[#allocation3 + $0xb0] sm:$0xf]
    %v222 = vld [vmem:[#allocation3 + $0xb4] sm:$0xf]
    %v223 = vld [vmem:[#allocation3 + $0xb8] sm:$0xf]
    %v224 = vld [vmem:[#allocation3 + $0xbc] sm:$0xf]
    %v225 = vld [vmem:[#allocation3 + $0xc0] sm:$0xf]
    %v226 = vld [vmem:[#allocation3 + $0xc4] sm:$0xf]
    %v227 = vld [vmem:[#allocation3 + $0xc8] sm:$0xf]
    %v228 = vld [vmem:[#allocation3 + $0xcc] sm:$0xf]
    %v229 = vld [vmem:[#allocation3 + $0xd0] sm:$0xf]
    %v230 = vld [vmem:[#allocation3 + $0xd4] sm:$0xf]
    %v231 = vld [vmem:[#allocation3 + $0xd8] sm:$0xf]
    %v232 = vld [vmem:[#allocation3 + $0xdc] sm:$0xf]
    %v233 = vld [vmem:[#allocation3 + $0xe0] sm:$0xf]
    %v234 = vld [vmem:[#allocation3 + $0xe4] sm:$0xf]
    %v235 = vld [vmem:[#allocation3 + $0xe8] sm:$0xf]
    %v236 = vld [vmem:[#allocation3 + $0xec] sm:$0xf]
    %v237 = vld [vmem:[#allocation3 + $0xf0] sm:$0xf]
    %v238 = vld [vmem:[#allocation3 + $0xf4] sm:$0xf]
    %v239 = vld [vmem:[#allocation3 + $0xf8] sm:$0xf]
    %v240 = vld [vmem:[#allocation3 + $0xfc] sm:$0xf]
    %v241 = vld [vmem:[#allocation6] sm:$0xf]
    %v242 = vld [vmem:[#allocation6 + $0x4] sm:$0xf]
    %v243 = vld [vmem:[#allocation6 + $0x8] sm:$0xf]
    %v244 = vld [vmem:[#allocation6 + $0xc] sm:$0xf]
    %v245 = vld [vmem:[#allocation6 + $0x10] sm:$0xf]
    %v246 = vld [vmem:[#allocation6 + $0x14] sm:$0xf]
    %v247 = vld [vmem:[#allocation6 + $0x18] sm:$0xf]
    %v248 = vld [vmem:[#allocation6 + $0x1c] sm:$0xf]
    %v249 = vld [vmem:[#allocation6 + $0x20] sm:$0xf]
    %v250 = vld [vmem:[#allocation6 + $0x24] sm:$0xf]
    %v251 = vld [vmem:[#allocation6 + $0x28] sm:$0xf]
    %v252 = vld [vmem:[#allocation6 + $0x2c] sm:$0xf]
    %v253 = vld [vmem:[#allocation6 + $0x30] sm:$0xf]
    %v254 = vld [vmem:[#allocation6 + $0x34] sm:$0xf]
    %v255 = vld [vmem:[#allocation6 + $0x38] sm:$0xf]
    %v256 = vld [vmem:[#allocation6 + $0x3c] sm:$0xf]
    %v321 = vunpack.c.l.b16 %v177
    %v322 = vunpack.c.l.b16 %v178
    %v323 = vunpack.c.l.b16 %v179
    %v324 = vunpack.c.l.b16 %v180
    %v325 = vunpack.c.l.b16 %v181
    %v326 = vunpack.c.l.b16 %v182
    %v327 = vunpack.c.l.b16 %v183
    %v328 = vunpack.c.l.b16 %v184
    %v329 = vunpack.c.l.b16 %v185
    %v330 = vunpack.c.l.b16 %v186
    %v331 = vunpack.c.l.b16 %v187
    %v332 = vunpack.c.l.b16 %v188
    %v333 = vunpack.c.l.b16 %v189
    %v334 = vunpack.c.l.b16 %v190
    %v335 = vunpack.c.l.b16 %v191
    %v336 = vunpack.c.l.b16 %v192
    %v337 = vunpack.c.l.b16 %v193
    %v338 = vunpack.c.l.b16 %v194
    %v339 = vunpack.c.l.b16 %v195
    %v340 = vunpack.c.l.b16 %v196
    %v341 = vunpack.c.l.b16 %v197
    %v342 = vunpack.c.l.b16 %v198
    %v343 = vunpack.c.l.b16 %v199
    %v344 = vunpack.c.l.b16 %v200
    %v345 = vunpack.c.l.b16 %v201
    %v346 = vunpack.c.l.b16 %v202
    %v347 = vunpack.c.l.b16 %v203
    %v348 = vunpack.c.l.b16 %v204
    %v349 = vunpack.c.l.b16 %v205
    %v350 = vunpack.c.l.b16 %v206
    %v351 = vunpack.c.l.b16 %v207
    %v352 = vunpack.c.l.b16 %v208
    %v353 = vunpack.c.l.b16 %v209
    %v354 = vunpack.c.l.b16 %v210
    %v355 = vunpack.c.l.b16 %v211
    %v356 = vunpack.c.l.b16 %v212
    %v357 = vunpack.c.l.b16 %v213
    %v358 = vunpack.c.l.b16 %v214
    %v359 = vunpack.c.l.b16 %v215
    %v360 = vunpack.c.l.b16 %v216
    %v361 = vunpack.c.l.b16 %v217
    %v362 = vunpack.c.l.b16 %v218
    %v363 = vunpack.c.l.b16 %v219
    %v364 = vunpack.c.l.b16 %v220
    %v365 = vunpack.c.l.b16 %v221
    %v366 = vunpack.c.l.b16 %v222
    %v367 = vunpack.c.l.b16 %v223
    %v368 = vunpack.c.l.b16 %v224
    %v369 = vunpack.c.l.b16 %v225
    %v370 = vunpack.c.l.b16 %v226
    %v371 = vunpack.c.l.b16 %v227
    %v372 = vunpack.c.l.b16 %v228
    %v373 = vunpack.c.l.b16 %v229
    %v374 = vunpack.c.l.b16 %v230
    %v375 = vunpack.c.l.b16 %v231
    %v376 = vunpack.c.l.b16 %v232
    %v377 = vunpack.c.l.b16 %v233
    %v378 = vunpack.c.l.b16 %v234
    %v379 = vunpack.c.l.b16 %v235
    %v380 = vunpack.c.l.b16 %v236
    %v381 = vunpack.c.l.b16 %v237
    %v382 = vunpack.c.l.b16 %v238
    %v383 = vunpack.c.l.b16 %v239
    %v384 = vunpack.c.l.b16 %v240
    %v385 = vpack.c.b16 %v322, %v321
    %v386 = vpack.c.b16 %v324, %v323
    %v387 = vpack.c.b16 %v326, %v325
    %v388 = vpack.c.b16 %v328, %v327
    %v389 = vpack.c.b16 %v330, %v329
    %v390 = vpack.c.b16 %v332, %v331
    %v391 = vpack.c.b16 %v334, %v333
    %v392 = vpack.c.b16 %v336, %v335
    %v393 = vpack.c.b16 %v338, %v337
    %v394 = vpack.c.b16 %v340, %v339
    %v395 = vpack.c.b16 %v342, %v341
    %v396 = vpack.c.b16 %v344, %v343
    %v397 = vpack.c.b16 %v346, %v345
    %v398 = vpack.c.b16 %v348, %v347
    %v399 = vpack.c.b16 %v350, %v349
    %v400 = vpack.c.b16 %v352, %v351
    %v401 = vpack.c.b16 %v354, %v353
    %v402 = vpack.c.b16 %v356, %v355
    %v403 = vpack.c.b16 %v358, %v357
    %v404 = vpack.c.b16 %v360, %v359
    %v405 = vpack.c.b16 %v362, %v361
    %v406 = vpack.c.b16 %v364, %v363
    %v407 = vpack.c.b16 %v366, %v365
    %v408 = vpack.c.b16 %v368, %v367
    %v409 = vpack.c.b16 %v370, %v369
    %v410 = vpack.c.b16 %v372, %v371
    %v411 = vpack.c.b16 %v374, %v373
    %v412 = vpack.c.b16 %v376, %v375
    %v413 = vpack.c.b16 %v378, %v377
    %v414 = vpack.c.b16 %v380, %v379
    %v415 = vpack.c.b16 %v382, %v381
    %v416 = vpack.c.b16 %v384, %v383
    %v465 = vunpack.c.l.b16 %v241
    %v466 = vunpack.c.l.b16 %v242
    %v467 = vunpack.c.l.b16 %v243
    %v468 = vunpack.c.l.b16 %v244
    %v469 = vunpack.c.l.b16 %v245
    %v470 = vunpack.c.l.b16 %v246
    %v471 = vunpack.c.l.b16 %v247
    %v472 = vunpack.c.l.b16 %v248
    %v473 = vunpack.c.l.b16 %v249
    %v474 = vunpack.c.l.b16 %v250
    %v475 = vunpack.c.l.b16 %v251
    %v476 = vunpack.c.l.b16 %v252
    %v477 = vunpack.c.l.b16 %v253
    %v478 = vunpack.c.l.b16 %v254
    %v479 = vunpack.c.l.b16 %v255
    %v480 = vunpack.c.l.b16 %v256
    %v481 = vpack.c.b16 %v466, %v465
    %v482 = vpack.c.b16 %v468, %v467
    %v483 = vpack.c.b16 %v470, %v469
    %v484 = vpack.c.b16 %v472, %v471
    %v485 = vpack.c.b16 %v474, %v473
    %v486 = vpack.c.b16 %v476, %v475
    %v487 = vpack.c.b16 %v478, %v477
    %v488 = vpack.c.b16 %v480, %v479
    %497 = vmatprep.subr.bf16.mxu0 0
    %498 = vmatpush1.bf16.msra.mxu0 %v481
    %499 = vmatprep.subr.bf16.mxu0 0
    %500 = vmatpush1.bf16.msra.mxu0 %v482
    %501 = vmatprep.subr.bf16.mxu0 0
    %502 = vmatpush1.bf16.msra.mxu0 %v483
    %503 = vmatprep.subr.bf16.mxu0 0
    %504 = vmatpush1.bf16.msra.mxu0 %v484
    %505 = vmatprep.subr.bf16.mxu0 0
    %506 = vmatpush1.bf16.msra.mxu0 %v485
    %507 = vmatprep.subr.bf16.mxu0 0
    %508 = vmatpush1.bf16.msra.mxu0 %v486
    %509 = vmatprep.subr.bf16.mxu0 0
    %510 = vmatpush1.bf16.msra.mxu0 %v487
    %511 = vmatprep.subr.bf16.mxu0 0
    %512 = vmatpush1.bf16.msra.mxu0 %v488
    %513 = vmatprep.subr.bf16.mxu0 0
    %514 = vmatpush1.bf16.msra.mxu0 0
    %515 = vmatprep.subr.bf16.mxu0 0
    %516 = vmatpush1.bf16.msra.mxu0 0
    %517 = vmatprep.subr.bf16.mxu0 0
    %518 = vmatpush1.bf16.msra.mxu0 0
    %519 = vmatprep.subr.bf16.mxu0 0
    %520 = vmatpush1.bf16.msra.mxu0 0
    %521 = vmatprep.subr.bf16.mxu0 0
    %522 = vmatpush1.bf16.msra.mxu0 0
    %523 = vmatprep.subr.bf16.mxu0 0
    %524 = vmatpush1.bf16.msra.mxu0 0
    %525 = vmatprep.subr.bf16.mxu0 0
    %526 = vmatpush1.bf16.msra.mxu0 0
    %527 = vmatprep.subr.bf16.mxu0 0
    %528 = vmatpush1.bf16.msra.mxu0 0
    %529 = vmatprep.mubr.bf16.mxu0 0
    %530 = vmatmul.mubr.bf16.gmra.mrb[0].mxu0 %v385
    %v531 = vpop.f32.mrb[0].mxu0
    %v532 = vadd.f32 0.0, %v531
    %v533 = vpop.f32.mrb[0].mxu0
    %v534 = vpop.f32.mrb[0].mxu0
    %v535 = vadd.f32 0.0, %v534
    %v536 = vpop.f32.mrb[0].mxu0
    %537 = vmatprep.mubr.bf16.mxu0 0
    %538 = vmatmul.mubr.bf16.gmra.mrb[0].mxu0 %v386
    %v539 = vpop.f32.mrb[0].mxu0
    %v540 = vadd.f32 0.0, %v539
    %v541 = vpop.f32.mrb[0].mxu0
    %v542 = vpop.f32.mrb[0].mxu0
    %v543 = vadd.f32 0.0, %v542
    %v544 = vpop.f32.mrb[0].mxu0
    %545 = vmatprep.mubr.bf16.mxu0 0
    %546 = vmatmul.mubr.bf16.gmra.mrb[0].mxu0 %v387
    %v547 = vpop.f32.mrb[0].mxu0
    %v548 = vadd.f32 0.0, %v547
    %v549 = vpop.f32.mrb[0].mxu0
    %v550 = vpop.f32.mrb[0].mxu0
    %v551 = vadd.f32 0.0, %v550
    %v552 = vpop.f32.mrb[0].mxu0
    %553 = vmatprep.mubr.bf16.mxu0 0
    %554 = vmatmul.mubr.bf16.gmra.mrb[0].mxu0 %v388
    %v555 = vpop.f32.mrb[0].mxu0
    %v556 = vadd.f32 0.0, %v555
    %v557 = vpop.f32.mrb[0].mxu0
    %v558 = vpop.f32.mrb[0].mxu0
    %v559 = vadd.f32 0.0, %v558
    %v560 = vpop.f32.mrb[0].mxu0
    %561 = vmatprep.mubr.bf16.mxu0 0
    %562 = vmatmul.mubr.bf16.gmra.mrb[0].mxu0 %v389
    %v563 = vpop.f32.mrb[0].mxu0
    %v564 = vadd.f32 0.0, %v563
    %v565 = vpop.f32.mrb[0].mxu0
    %v566 = vpop.f32.mrb[0].mxu0
    %v567 = vadd.f32 0.0, %v566
    %v568 = vpop.f32.mrb[0].mxu0
    %569 = vmatprep.mubr.bf16.mxu0 0
    %570 = vmatmul.mubr.bf16.gmra.mrb[0].mxu0 %v390
    %v571 = vpop.f32.mrb[0].mxu0
    %v572 = vadd.f32 0.0, %v571
    %v573 = vpop.f32.mrb[0].mxu0
    %v574 = vpop.f32.mrb[0].mxu0
    %v575 = vadd.f32 0.0, %v574
    %v576 = vpop.f32.mrb[0].mxu0
    %577 = vmatprep.mubr.bf16.mxu0 0
    %578 = vmatmul.mubr.bf16.gmra.mrb[0].mxu0 %v391
    %v579 = vpop.f32.mrb[0].mxu0
    %v580 = vadd.f32 0.0, %v579
    %v581 = vpop.f32.mrb[0].mxu0
    %v582 = vpop.f32.mrb[0].mxu0
    %v583 = vadd.f32 0.0, %v582
    %v584 = vpop.f32.mrb[0].mxu0
    %585 = vmatprep.mubr.bf16.mxu0 0
    %586 = vmatmul.mubr.bf16.gmra.mrb[0].mxu0 %v392
    %v587 = vpop.f32.mrb[0].mxu0
    %v588 = vadd.f32 0.0, %v587
    %v589 = vpop.f32.mrb[0].mxu0
    %v590 = vpop.f32.mrb[0].mxu0
    %v591 = vadd.f32 0.0, %v590
    %v592 = vpop.f32.mrb[0].mxu0
    %593 = vmatprep.mubr.bf16.mxu0 0
    %594 = vmatmul.mubr.bf16.gmra.mrb[0].mxu0 %v393
    %v595 = vpop.f32.mrb[0].mxu0
    %v596 = vadd.f32 0.0, %v595
    %v597 = vpop.f32.mrb[0].mxu0
    %v598 = vpop.f32.mrb[0].mxu0
    %v599 = vadd.f32 0.0, %v598
    %v600 = vpop.f32.mrb[0].mxu0
    %601 = vmatprep.mubr.bf16.mxu0 0
    %602 = vmatmul.mubr.bf16.gmra.mrb[0].mxu0 %v394
    %v603 = vpop.f32.mrb[0].mxu0
    %v604 = vadd.f32 0.0, %v603
    %v605 = vpop.f32.mrb[0].mxu0
    %v606 = vpop.f32.mrb[0].mxu0
    %v607 = vadd.f32 0.0, %v606
    %v608 = vpop.f32.mrb[0].mxu0
    %609 = vmatprep.mubr.bf16.mxu0 0
    %610 = vmatmul.mubr.bf16.gmra.mrb[0].mxu0 %v395
    %v611 = vpop.f32.mrb[0].mxu0
    %v612 = vadd.f32 0.0, %v611
    %v613 = vpop.f32.mrb[0].mxu0
    %v614 = vpop.f32.mrb[0].mxu0
    %v615 = vadd.f32 0.0, %v614
    %v616 = vpop.f32.mrb[0].mxu0
    %617 = vmatprep.mubr.bf16.mxu0 0
    %618 = vmatmul.mubr.bf16.gmra.mrb[0].mxu0 %v396
    %v619 = vpop.f32.mrb[0].mxu0
    %v620 = vadd.f32 0.0, %v619
    %v621 = vpop.f32.mrb[0].mxu0
    %v622 = vpop.f32.mrb[0].mxu0
    %v623 = vadd.f32 0.0, %v622
    %v624 = vpop.f32.mrb[0].mxu0
    %625 = vmatprep.mubr.bf16.mxu0 0
    %626 = vmatmul.mubr.bf16.gmra.mrb[0].mxu0 %v397
    %v627 = vpop.f32.mrb[0].mxu0
    %v628 = vadd.f32 0.0, %v627
    %v629 = vpop.f32.mrb[0].mxu0
    %v630 = vpop.f32.mrb[0].mxu0
    %v631 = vadd.f32 0.0, %v630
    %v632 = vpop.f32.mrb[0].mxu0
    %633 = vmatprep.mubr.bf16.mxu0 0
    %634 = vmatmul.mubr.bf16.gmra.mrb[0].mxu0 %v398
    %v635 = vpop.f32.mrb[0].mxu0
    %v636 = vadd.f32 0.0, %v635
    %v637 = vpop.f32.mrb[0].mxu0
    %v638 = vpop.f32.mrb[0].mxu0
    %v639 = vadd.f32 0.0, %v638
    %v640 = vpop.f32.mrb[0].mxu0
    %641 = vmatprep.mubr.bf16.mxu0 0
    %642 = vmatmul.mubr.bf16.gmra.mrb[0].mxu0 %v399
    %v643 = vpop.f32.mrb[0].mxu0
    %v644 = vadd.f32 0.0, %v643
    %v645 = vpop.f32.mrb[0].mxu0
    %v646 = vpop.f32.mrb[0].mxu0
    %v647 = vadd.f32 0.0, %v646
    %v648 = vpop.f32.mrb[0].mxu0
    %649 = vmatprep.mubr.bf16.mxu0 0
    %650 = vmatmul.mubr.bf16.gmra.mrb[0].mxu0 %v400
    %v651 = vpop.f32.mrb[0].mxu0
    %v652 = vadd.f32 0.0, %v651
    %v653 = vpop.f32.mrb[0].mxu0
    %v654 = vpop.f32.mrb[0].mxu0
    %v655 = vadd.f32 0.0, %v654
    %v656 = vpop.f32.mrb[0].mxu0
    %657 = vmatprep.mubr.bf16.mxu0 0
    %658 = vmatmul.mubr.bf16.gmra.mrb[0].mxu0 %v401
    %v659 = vpop.f32.mrb[0].mxu0
    %v660 = vadd.f32 0.0, %v659
    %v661 = vpop.f32.mrb[0].mxu0
    %v662 = vpop.f32.mrb[0].mxu0
    %v663 = vadd.f32 0.0, %v662
    %v664 = vpop.f32.mrb[0].mxu0
    %665 = vmatprep.mubr.bf16.mxu0 0
    %666 = vmatmul.mubr.bf16.gmra.mrb[0].mxu0 %v402
    %v667 = vpop.f32.mrb[0].mxu0
    %v668 = vadd.f32 0.0, %v667
    %v669 = vpop.f32.mrb[0].mxu0
    %v670 = vpop.f32.mrb[0].mxu0
    %v671 = vadd.f32 0.0, %v670
    %v672 = vpop.f32.mrb[0].mxu0
    %673 = vmatprep.mubr.bf16.mxu0 0
    %674 = vmatmul.mubr.bf16.gmra.mrb[0].mxu0 %v403
    %v675 = vpop.f32.mrb[0].mxu0
    %v676 = vadd.f32 0.0, %v675
    %v677 = vpop.f32.mrb[0].mxu0
    %v678 = vpop.f32.mrb[0].mxu0
    %v679 = vadd.f32 0.0, %v678
    %v680 = vpop.f32.mrb[0].mxu0
    %681 = vmatprep.mubr.bf16.mxu0 0
    %682 = vmatmul.mubr.bf16.gmra.mrb[0].mxu0 %v404
    %v683 = vpop.f32.mrb[0].mxu0
    %v684 = vadd.f32 0.0, %v683
    %v685 = vpop.f32.mrb[0].mxu0
    %v686 = vpop.f32.mrb[0].mxu0
    %v687 = vadd.f32 0.0, %v686
    %v688 = vpop.f32.mrb[0].mxu0
    %689 = vmatprep.mubr.bf16.mxu0 0
    %690 = vmatmul.mubr.bf16.gmra.mrb[0].mxu0 %v405
    %v691 = vpop.f32.mrb[0].mxu0
    %v692 = vadd.f32 0.0, %v691
    %v693 = vpop.f32.mrb[0].mxu0
    %v694 = vpop.f32.mrb[0].mxu0
    %v695 = vadd.f32 0.0, %v694
    %v696 = vpop.f32.mrb[0].mxu0
    %697 = vmatprep.mubr.bf16.mxu0 0
    %698 = vmatmul.mubr.bf16.gmra.mrb[0].mxu0 %v406
    %v699 = vpop.f32.mrb[0].mxu0
    %v700 = vadd.f32 0.0, %v699
    %v701 = vpop.f32.mrb[0].mxu0
    %v702 = vpop.f32.mrb[0].mxu0
    %v703 = vadd.f32 0.0, %v702
    %v704 = vpop.f32.mrb[0].mxu0
    %705 = vmatprep.mubr.bf16.mxu0 0
    %706 = vmatmul.mubr.bf16.gmra.mrb[0].mxu0 %v407
    %v707 = vpop.f32.mrb[0].mxu0
    %v708 = vadd.f32 0.0, %v707
    %v709 = vpop.f32.mrb[0].mxu0
    %v710 = vpop.f32.mrb[0].mxu0
    %v711 = vadd.f32 0.0, %v710
    %v712 = vpop.f32.mrb[0].mxu0
    %713 = vmatprep.mubr.bf16.mxu0 0
    %714 = vmatmul.mubr.bf16.gmra.mrb[0].mxu0 %v408
    %v715 = vpop.f32.mrb[0].mxu0
    %v716 = vadd.f32 0.0, %v715
    %v717 = vpop.f32.mrb[0].mxu0
    %v718 = vpop.f32.mrb[0].mxu0
    %v719 = vadd.f32 0.0, %v718
    %v720 = vpop.f32.mrb[0].mxu0
    %721 = vmatprep.mubr.bf16.mxu0 0
    %722 = vmatmul.mubr.bf16.gmra.mrb[0].mxu0 %v409
    %v723 = vpop.f32.mrb[0].mxu0
    %v724 = vadd.f32 0.0, %v723
    %v725 = vpop.f32.mrb[0].mxu0
    %v726 = vpop.f32.mrb[0].mxu0
    %v727 = vadd.f32 0.0, %v726
    %v728 = vpop.f32.mrb[0].mxu0
    %729 = vmatprep.mubr.bf16.mxu0 0
    %730 = vmatmul.mubr.bf16.gmra.mrb[0].mxu0 %v410
    %v731 = vpop.f32.mrb[0].mxu0
    %v732 = vadd.f32 0.0, %v731
    %v733 = vpop.f32.mrb[0].mxu0
    %v734 = vpop.f32.mrb[0].mxu0
    %v735 = vadd.f32 0.0, %v734
    %v736 = vpop.f32.mrb[0].mxu0
    %737 = vmatprep.mubr.bf16.mxu0 0
    %738 = vmatmul.mubr.bf16.gmra.mrb[0].mxu0 %v411
    %v739 = vpop.f32.mrb[0].mxu0
    %v740 = vadd.f32 0.0, %v739
    %v741 = vpop.f32.mrb[0].mxu0
    %v742 = vpop.f32.mrb[0].mxu0
    %v743 = vadd.f32 0.0, %v742
    %v744 = vpop.f32.mrb[0].mxu0
    %745 = vmatprep.mubr.bf16.mxu0 0
    %746 = vmatmul.mubr.bf16.gmra.mrb[0].mxu0 %v412
    %v747 = vpop.f32.mrb[0].mxu0
    %v748 = vadd.f32 0.0, %v747
    %v749 = vpop.f32.mrb[0].mxu0
    %v750 = vpop.f32.mrb[0].mxu0
    %v751 = vadd.f32 0.0, %v750
    %v752 = vpop.f32.mrb[0].mxu0
    %753 = vmatprep.mubr.bf16.mxu0 0
    %754 = vmatmul.mubr.bf16.gmra.mrb[0].mxu0 %v413
    %v755 = vpop.f32.mrb[0].mxu0
    %v756 = vadd.f32 0.0, %v755
    %v757 = vpop.f32.mrb[0].mxu0
    %v758 = vpop.f32.mrb[0].mxu0
    %v759 = vadd.f32 0.0, %v758
    %v760 = vpop.f32.mrb[0].mxu0
    %761 = vmatprep.mubr.bf16.mxu0 0
    %762 = vmatmul.mubr.bf16.gmra.mrb[0].mxu0 %v414
    %v763 = vpop.f32.mrb[0].mxu0
    %v764 = vadd.f32 0.0, %v763
    %v765 = vpop.f32.mrb[0].mxu0
    %v766 = vpop.f32.mrb[0].mxu0
    %v767 = vadd.f32 0.0, %v766
    %v768 = vpop.f32.mrb[0].mxu0
    %769 = vmatprep.mubr.bf16.mxu0 0
    %770 = vmatmul.mubr.bf16.gmra.mrb[0].mxu0 %v415
    %v771 = vpop.f32.mrb[0].mxu0
    %v772 = vadd.f32 0.0, %v771
    %v773 = vpop.f32.mrb[0].mxu0
    %v774 = vpop.f32.mrb[0].mxu0
    %v775 = vadd.f32 0.0, %v774
    %v776 = vpop.f32.mrb[0].mxu0
    %777 = vmatprep.mubr.bf16.mxu0 0
    %778 = vmatmul.mubr.bf16.gmra.mrb[0].mxu0 %v416
    %v779 = vpop.f32.mrb[0].mxu0
    %v780 = vadd.f32 0.0, %v779
    %v781 = vpop.f32.mrb[0].mxu0
    %v782 = vpop.f32.mrb[0].mxu0
    %v783 = vadd.f32 0.0, %v782
    %v784 = vpop.f32.mrb[0].mxu0
    %785 = vdwg.mxu0
    %v786 = vadd.f32 %v113, %v532
    %v787 = vadd.f32 %v114, %v535
    %v788 = vadd.f32 %v115, %v540
    %v789 = vadd.f32 %v116, %v543
    %v790 = vadd.f32 %v117, %v548
    %v791 = vadd.f32 %v118, %v551
    %v792 = vadd.f32 %v119, %v556
    %v793 = vadd.f32 %v120, %v559
    %v794 = vadd.f32 %v121, %v564
    %v795 = vadd.f32 %v122, %v567
    %v796 = vadd.f32 %v123, %v572
    %v797 = vadd.f32 %v124, %v575
    %v798 = vadd.f32 %v125, %v580
    %v799 = vadd.f32 %v126, %v583
    %v800 = vadd.f32 %v127, %v588
    %v801 = vadd.f32 %v128, %v591
    %v802 = vadd.f32 %v129, %v596
    %v803 = vadd.f32 %v130, %v599
    %v804 = vadd.f32 %v131, %v604
    %v805 = vadd.f32 %v132, %v607
    %v806 = vadd.f32 %v133, %v612
    %v807 = vadd.f32 %v134, %v615
    %v808 = vadd.f32 %v135, %v620
    %v809 = vadd.f32 %v136, %v623
    %v810 = vadd.f32 %v137, %v628
    %v811 = vadd.f32 %v138, %v631
    %v812 = vadd.f32 %v139, %v636
    %v813 = vadd.f32 %v140, %v639
    %v814 = vadd.f32 %v141, %v644
    %v815 = vadd.f32 %v142, %v647
    %v816 = vadd.f32 %v143, %v652
    %v817 = vadd.f32 %v144, %v655
    %v818 = vadd.f32 %v145, %v660
    %v819 = vadd.f32 %v146, %v663
    %v820 = vadd.f32 %v147, %v668
    %v821 = vadd.f32 %v148, %v671
    %v822 = vadd.f32 %v149, %v676
    %v823 = vadd.f32 %v150, %v679
    %v824 = vadd.f32 %v151, %v684
    %v825 = vadd.f32 %v152, %v687
    %v826 = vadd.f32 %v153, %v692
    %v827 = vadd.f32 %v154, %v695
    %v828 = vadd.f32 %v155, %v700
    %v829 = vadd.f32 %v156, %v703
    %v830 = vadd.f32 %v157, %v708
    %v831 = vadd.f32 %v158, %v711
    %v832 = vadd.f32 %v159, %v716
    %v833 = vadd.f32 %v160, %v719
    %v834 = vadd.f32 %v161, %v724
    %v835 = vadd.f32 %v162, %v727
    %v836 = vadd.f32 %v163, %v732
    %v837 = vadd.f32 %v164, %v735
    %v838 = vadd.f32 %v165, %v740
    %v839 = vadd.f32 %v166, %v743
    %v840 = vadd.f32 %v167, %v748
    %v841 = vadd.f32 %v168, %v751
    %v842 = vadd.f32 %v169, %v756
    %v843 = vadd.f32 %v170, %v759
    %v844 = vadd.f32 %v171, %v764
    %v845 = vadd.f32 %v172, %v767
    %v846 = vadd.f32 %v173, %v772
    %v847 = vadd.f32 %v174, %v775
    %v848 = vadd.f32 %v175, %v780
    %v849 = vadd.f32 %v176, %v783
    %850 = vst [vmem:[#allocation2] sm:$0xff] %v786
    %851 = vst [vmem:[#allocation2 + $0x8] sm:$0xff] %v787
    %852 = vst [vmem:[#allocation2 + $0x10] sm:$0xff] %v788
    %853 = vst [vmem:[#allocation2 + $0x18] sm:$0xff] %v789
    %854 = vst [vmem:[#allocation2 + $0x20] sm:$0xff] %v790
    %855 = vst [vmem:[#allocation2 + $0x28] sm:$0xff] %v791
    %856 = vst [vmem:[#allocation2 + $0x30] sm:$0xff] %v792
    %857 = vst [vmem:[#allocation2 + $0x38] sm:$0xff] %v793
    %858 = vst [vmem:[#allocation2 + $0x40] sm:$0xff] %v794
    %859 = vst [vmem:[#allocation2 + $0x48] sm:$0xff] %v795
    %860 = vst [vmem:[#allocation2 + $0x50] sm:$0xff] %v796
    %861 = vst [vmem:[#allocation2 + $0x58] sm:$0xff] %v797
    %862 = vst [vmem:[#allocation2 + $0x60] sm:$0xff] %v798
    %863 = vst [vmem:[#allocation2 + $0x68] sm:$0xff] %v799
    %864 = vst [vmem:[#allocation2 + $0x70] sm:$0xff] %v800
    %865 = vst [vmem:[#allocation2 + $0x78] sm:$0xff] %v801
    %866 = vst [vmem:[#allocation2 + $0x80] sm:$0xff] %v802
    %867 = vst [vmem:[#allocation2 + $0x88] sm:$0xff] %v803
    %868 = vst [vmem:[#allocation2 + $0x90] sm:$0xff] %v804
    %869 = vst [vmem:[#allocation2 + $0x98] sm:$0xff] %v805
    %870 = vst [vmem:[#allocation2 + $0xa0] sm:$0xff] %v806
    %871 = vst [vmem:[#allocation2 + $0xa8] sm:$0xff] %v807
    %872 = vst [vmem:[#allocation2 + $0xb0] sm:$0xff] %v808
    %873 = vst [vmem:[#allocation2 + $0xb8] sm:$0xff] %v809
    %874 = vst [vmem:[#allocation2 + $0xc0] sm:$0xff] %v810
    %875 = vst [vmem:[#allocation2 + $0xc8] sm:$0xff] %v811
    %876 = vst [vmem:[#allocation2 + $0xd0] sm:$0xff] %v812
    %877 = vst [vmem:[#allocation2 + $0xd8] sm:$0xff] %v813
    %878 = vst [vmem:[#allocation2 + $0xe0] sm:$0xff] %v814
    %879 = vst [vmem:[#allocation2 + $0xe8] sm:$0xff] %v815
    %880 = vst [vmem:[#allocation2 + $0xf0] sm:$0xff] %v816
    %881 = vst [vmem:[#allocation2 + $0xf8] sm:$0xff] %v817
    %882 = vst [vmem:[#allocation2 + $0x100] sm:$0xff] %v818
    %883 = vst [vmem:[#allocation2 + $0x108] sm:$0xff] %v819
    %884 = vst [vmem:[#allocation2 + $0x110] sm:$0xff] %v820
    %885 = vst [vmem:[#allocation2 + $0x118] sm:$0xff] %v821
    %886 = vst [vmem:[#allocation2 + $0x120] sm:$0xff] %v822
    %887 = vst [vmem:[#allocation2 + $0x128] sm:$0xff] %v823
    %888 = vst [vmem:[#allocation2 + $0x130] sm:$0xff] %v824
    %889 = vst [vmem:[#allocation2 + $0x138] sm:$0xff] %v825
    %890 = vst [vmem:[#allocation2 + $0x140] sm:$0xff] %v826
    %891 = vst [vmem:[#allocation2 + $0x148] sm:$0xff] %v827
    %892 = vst [vmem:[#allocation2 + $0x150] sm:$0xff] %v828
    %893 = vst [vmem:[#allocation2 + $0x158] sm:$0xff] %v829
    %894 = vst [vmem:[#allocation2 + $0x160] sm:$0xff] %v830
    %895 = vst [vmem:[#allocation2 + $0x168] sm:$0xff] %v831
    %896 = vst [vmem:[#allocation2 + $0x170] sm:$0xff] %v832
    %897 = vst [vmem:[#allocation2 + $0x178] sm:$0xff] %v833
    %898 = vst [vmem:[#allocation2 + $0x180] sm:$0xff] %v834
    %899 = vst [vmem:[#allocation2 + $0x188] sm:$0xff] %v835
    %900 = vst [vmem:[#allocation2 + $0x190] sm:$0xff] %v836
    %901 = vst [vmem:[#allocation2 + $0x198] sm:$0xff] %v837
    %902 = vst [vmem:[#allocation2 + $0x1a0] sm:$0xff] %v838
    %903 = vst [vmem:[#allocation2 + $0x1a8] sm:$0xff] %v839
    %904 = vst [vmem:[#allocation2 + $0x1b0] sm:$0xff] %v840
    %905 = vst [vmem:[#allocation2 + $0x1b8] sm:$0xff] %v841
    %906 = vst [vmem:[#allocation2 + $0x1c0] sm:$0xff] %v842
    %907 = vst [vmem:[#allocation2 + $0x1c8] sm:$0xff] %v843
    %908 = vst [vmem:[#allocation2 + $0x1d0] sm:$0xff] %v844
    %909 = vst [vmem:[#allocation2 + $0x1d8] sm:$0xff] %v845
    %910 = vst [vmem:[#allocation2 + $0x1e0] sm:$0xff] %v846
    %911 = vst [vmem:[#allocation2 + $0x1e8] sm:$0xff] %v847
    %912 = vst [vmem:[#allocation2 + $0x1f0] sm:$0xff] %v848
    %913 = vst [vmem:[#allocation2 + $0x1f8] sm:$0xff] %v849
    // Predicated region
    $region22: #{tpu_custom_call.1} parent=1 // pred_check
      %p914 = pneg %p45
    $region23: #{tpu_custom_call.1} parent=1 // pred_check_branch
      %916 = sbr.rel (%p914) target = $region25
    $region24: #{tpu_custom_call.1} parent=1 // pred_region
      %v917 = vld [vmem:[#allocation2] sm:$0xff]
      %v918 = vld [vmem:[#allocation2 + $0x8] sm:$0xff]
      %v919 = vld [vmem:[#allocation2 + $0x10] sm:$0xff]
      %v920 = vld [vmem:[#allocation2 + $0x18] sm:$0xff]
      %v921 = vld [vmem:[#allocation2 + $0x20] sm:$0xff]
      %v922 = vld [vmem:[#allocation2 + $0x28] sm:$0xff]
      %v923 = vld [vmem:[#allocation2 + $0x30] sm:$0xff]
      %v924 = vld [vmem:[#allocation2 + $0x38] sm:$0xff]
      %v925 = vld [vmem:[#allocation2 + $0x40] sm:$0xff]
      %v926 = vld [vmem:[#allocation2 + $0x48] sm:$0xff]
      %v927 = vld [vmem:[#allocation2 + $0x50] sm:$0xff]
      %v928 = vld [vmem:[#allocation2 + $0x58] sm:$0xff]
      %v929 = vld [vmem:[#allocation2 + $0x60] sm:$0xff]
      %v930 = vld [vmem:[#allocation2 + $0x68] sm:$0xff]
      %v931 = vld [vmem:[#allocation2 + $0x70] sm:$0xff]
      %v932 = vld [vmem:[#allocation2 + $0x78] sm:$0xff]
      %v933 = vld [vmem:[#allocation2 + $0x80] sm:$0xff]
      %v934 = vld [vmem:[#allocation2 + $0x88] sm:$0xff]
      %v935 = vld [vmem:[#allocation2 + $0x90] sm:$0xff]
      %v936 = vld [vmem:[#allocation2 + $0x98] sm:$0xff]
      %v937 = vld [vmem:[#allocation2 + $0xa0] sm:$0xff]
      %v938 = vld [vmem:[#allocation2 + $0xa8] sm:$0xff]
      %v939 = vld [vmem:[#allocation2 + $0xb0] sm:$0xff]
      %v940 = vld [vmem:[#allocation2 + $0xb8] sm:$0xff]
      %v941 = vld [vmem:[#allocation2 + $0xc0] sm:$0xff]
      %v942 = vld [vmem:[#allocation2 + $0xc8] sm:$0xff]
      %v943 = vld [vmem:[#allocation2 + $0xd0] sm:$0xff]
      %v944 = vld [vmem:[#allocation2 + $0xd8] sm:$0xff]
      %v945 = vld [vmem:[#allocation2 + $0xe0] sm:$0xff]
      %v946 = vld [vmem:[#allocation2 + $0xe8] sm:$0xff]
      %v947 = vld [vmem:[#allocation2 + $0xf0] sm:$0xff]
      %v948 = vld [vmem:[#allocation2 + $0xf8] sm:$0xff]
      %v949 = vld [vmem:[#allocation2 + $0x100] sm:$0xff]
      %v950 = vld [vmem:[#allocation2 + $0x108] sm:$0xff]
      %v951 = vld [vmem:[#allocation2 + $0x110] sm:$0xff]
      %v952 = vld [vmem:[#allocation2 + $0x118] sm:$0xff]
      %v953 = vld [vmem:[#allocation2 + $0x120] sm:$0xff]
      %v954 = vld [vmem:[#allocation2 + $0x128] sm:$0xff]
      %v955 = vld [vmem:[#allocation2 + $0x130] sm:$0xff]
      %v956 = vld [vmem:[#allocation2 + $0x138] sm:$0xff]
      %v957 = vld [vmem:[#allocation2 + $0x140] sm:$0xff]
      %v958 = vld [vmem:[#allocation2 + $0x148] sm:$0xff]
      %v959 = vld [vmem:[#allocation2 + $0x150] sm:$0xff]
      %v960 = vld [vmem:[#allocation2 + $0x158] sm:$0xff]
      %v961 = vld [vmem:[#allocation2 + $0x160] sm:$0xff]
      %v962 = vld [vmem:[#allocation2 + $0x168] sm:$0xff]
      %v963 = vld [vmem:[#allocation2 + $0x170] sm:$0xff]
      %v964 = vld [vmem:[#allocation2 + $0x178] sm:$0xff]
      %v965 = vld [vmem:[#allocation2 + $0x180] sm:$0xff]
      %v966 = vld [vmem:[#allocation2 + $0x188] sm:$0xff]
      %v967 = vld [vmem:[#allocation2 + $0x190] sm:$0xff]
      %v968 = vld [vmem:[#allocation2 + $0x198] sm:$0xff]
      %v969 = vld [vmem:[#allocation2 + $0x1a0] sm:$0xff]
      %v970 = vld [vmem:[#allocation2 + $0x1a8] sm:$0xff]
      %v971 = vld [vmem:[#allocation2 + $0x1b0] sm:$0xff]
      %v972 = vld [vmem:[#allocation2 + $0x1b8] sm:$0xff]
      %v973 = vld [vmem:[#allocation2 + $0x1c0] sm:$0xff]
      %v974 = vld [vmem:[#allocation2 + $0x1c8] sm:$0xff]
      %v975 = vld [vmem:[#allocation2 + $0x1d0] sm:$0xff]
      %v976 = vld [vmem:[#allocation2 + $0x1d8] sm:$0xff]
      %v977 = vld [vmem:[#allocation2 + $0x1e0] sm:$0xff]
      %v978 = vld [vmem:[#allocation2 + $0x1e8] sm:$0xff]
      %v979 = vld [vmem:[#allocation2 + $0x1f0] sm:$0xff]
      %v980 = vld [vmem:[#allocation2 + $0x1f8] sm:$0xff]
      %v981 = vpack.c.bf16 %v918, %v917
      %v982 = vpack.c.bf16 %v920, %v919
      %v983 = vpack.c.bf16 %v922, %v921
      %v984 = vpack.c.bf16 %v924, %v923
      %v985 = vpack.c.bf16 %v926, %v925
      %v986 = vpack.c.bf16 %v928, %v927
      %v987 = vpack.c.bf16 %v930, %v929
      %v988 = vpack.c.bf16 %v932, %v931
      %v989 = vpack.c.bf16 %v934, %v933
      %v990 = vpack.c.bf16 %v936, %v935
      %v991 = vpack.c.bf16 %v938, %v937
      %v992 = vpack.c.bf16 %v940, %v939
      %v993 = vpack.c.bf16 %v942, %v941
      %v994 = vpack.c.bf16 %v944, %v943
      %v995 = vpack.c.bf16 %v946, %v945
      %v996 = vpack.c.bf16 %v948, %v947
      %v997 = vpack.c.bf16 %v950, %v949
      %v998 = vpack.c.bf16 %v952, %v951
      %v999 = vpack.c.bf16 %v954, %v953
      %v1000 = vpack.c.bf16 %v956, %v955
      %v1001 = vpack.c.bf16 %v958, %v957
      %v1002 = vpack.c.bf16 %v960, %v959
      %v1003 = vpack.c.bf16 %v962, %v961
      %v1004 = vpack.c.bf16 %v964, %v963
      %v1005 = vpack.c.bf16 %v966, %v965
      %v1006 = vpack.c.bf16 %v968, %v967
      %v1007 = vpack.c.bf16 %v970, %v969
      %v1008 = vpack.c.bf16 %v972, %v971
      %v1009 = vpack.c.bf16 %v974, %v973
      %v1010 = vpack.c.bf16 %v976, %v975
      %v1011 = vpack.c.bf16 %v978, %v977
      %v1012 = vpack.c.bf16 %v980, %v979
      %v1045 = vunpack.c.l.b16 %v981
      %v1046 = vunpack.c.h.b16 %v981
      %v1047 = vunpack.c.l.b16 %v982
      %v1048 = vunpack.c.h.b16 %v982
      %v1049 = vunpack.c.l.b16 %v983
      %v1050 = vunpack.c.h.b16 %v983
      %v1051 = vunpack.c.l.b16 %v984
      %v1052 = vunpack.c.h.b16 %v984
      %v1053 = vunpack.c.l.b16 %v985
      %v1054 = vunpack.c.h.b16 %v985
      %v1055 = vunpack.c.l.b16 %v986
      %v1056 = vunpack.c.h.b16 %v986
      %v1057 = vunpack.c.l.b16 %v987
      %v1058 = vunpack.c.h.b16 %v987
      %v1059 = vunpack.c.l.b16 %v988
      %v1060 = vunpack.c.h.b16 %v988
      %v1061 = vunpack.c.l.b16 %v989
      %v1062 = vunpack.c.h.b16 %v989
      %v1063 = vunpack.c.l.b16 %v990
      %v1064 = vunpack.c.h.b16 %v990
      %v1065 = vunpack.c.l.b16 %v991
      %v1066 = vunpack.c.h.b16 %v991
      %v1067 = vunpack.c.l.b16 %v992
      %v1068 = vunpack.c.h.b16 %v992
      %v1069 = vunpack.c.l.b16 %v993
      %v1070 = vunpack.c.h.b16 %v993
      %v1071 = vunpack.c.l.b16 %v994
      %v1072 = vunpack.c.h.b16 %v994
      %v1073 = vunpack.c.l.b16 %v995
      %v1074 = vunpack.c.h.b16 %v995
      %v1075 = vunpack.c.l.b16 %v996
      %v1076 = vunpack.c.h.b16 %v996
      %v1077 = vunpack.c.l.b16 %v997
      %v1078 = vunpack.c.h.b16 %v997
      %v1079 = vunpack.c.l.b16 %v998
      %v1080 = vunpack.c.h.b16 %v998
      %v1081 = vunpack.c.l.b16 %v999
      %v1082 = vunpack.c.h.b16 %v999
      %v1083 = vunpack.c.l.b16 %v1000
      %v1084 = vunpack.c.h.b16 %v1000
      %v1085 = vunpack.c.l.b16 %v1001
      %v1086 = vunpack.c.h.b16 %v1001
      %v1087 = vunpack.c.l.b16 %v1002
      %v1088 = vunpack.c.h.b16 %v1002
      %v1089 = vunpack.c.l.b16 %v1003
      %v1090 = vunpack.c.h.b16 %v1003
      %v1091 = vunpack.c.l.b16 %v1004
      %v1092 = vunpack.c.h.b16 %v1004
      %v1093 = vunpack.c.l.b16 %v1005
      %v1094 = vunpack.c.h.b16 %v1005
      %v1095 = vunpack.c.l.b16 %v1006
      %v1096 = vunpack.c.h.b16 %v1006
      %v1097 = vunpack.c.l.b16 %v1007
      %v1098 = vunpack.c.h.b16 %v1007
      %v1099 = vunpack.c.l.b16 %v1008
      %v1100 = vunpack.c.h.b16 %v1008
      %v1101 = vunpack.c.l.b16 %v1009
      %v1102 = vunpack.c.h.b16 %v1009
      %v1103 = vunpack.c.l.b16 %v1010
      %v1104 = vunpack.c.h.b16 %v1010
      %v1105 = vunpack.c.l.b16 %v1011
      %v1106 = vunpack.c.h.b16 %v1011
      %v1107 = vunpack.c.l.b16 %v1012
      %v1108 = vunpack.c.h.b16 %v1012
      %v1109 = vpack.c.b16 %v1045, %v1045
      %v1110 = vpack.c.b16 %v1046, %v1046
      %v1111 = vpack.c.b16 %v1047, %v1047
      %v1112 = vpack.c.b16 %v1048, %v1048
      %v1113 = vpack.c.b16 %v1049, %v1049
      %v1114 = vpack.c.b16 %v1050, %v1050
      %v1115 = vpack.c.b16 %v1051, %v1051
      %v1116 = vpack.c.b16 %v1052, %v1052
      %v1117 = vpack.c.b16 %v1053, %v1053
      %v1118 = vpack.c.b16 %v1054, %v1054
      %v1119 = vpack.c.b16 %v1055, %v1055
      %v1120 = vpack.c.b16 %v1056, %v1056
      %v1121 = vpack.c.b16 %v1057, %v1057
      %v1122 = vpack.c.b16 %v1058, %v1058
      %v1123 = vpack.c.b16 %v1059, %v1059
      %v1124 = vpack.c.b16 %v1060, %v1060
      %v1125 = vpack.c.b16 %v1061, %v1061
      %v1126 = vpack.c.b16 %v1062, %v1062
      %v1127 = vpack.c.b16 %v1063, %v1063
      %v1128 = vpack.c.b16 %v1064, %v1064
      %v1129 = vpack.c.b16 %v1065, %v1065
      %v1130 = vpack.c.b16 %v1066, %v1066
      %v1131 = vpack.c.b16 %v1067, %v1067
      %v1132 = vpack.c.b16 %v1068, %v1068
      %v1133 = vpack.c.b16 %v1069, %v1069
      %v1134 = vpack.c.b16 %v1070, %v1070
      %v1135 = vpack.c.b16 %v1071, %v1071
      %v1136 = vpack.c.b16 %v1072, %v1072
      %v1137 = vpack.c.b16 %v1073, %v1073
      %v1138 = vpack.c.b16 %v1074, %v1074
      %v1139 = vpack.c.b16 %v1075, %v1075
      %v1140 = vpack.c.b16 %v1076, %v1076
      %v1141 = vpack.c.b16 %v1077, %v1077
      %v1142 = vpack.c.b16 %v1078, %v1078
      %v1143 = vpack.c.b16 %v1079, %v1079
      %v1144 = vpack.c.b16 %v1080, %v1080
      %v1145 = vpack.c.b16 %v1081, %v1081
      %v1146 = vpack.c.b16 %v1082, %v1082
      %v1147 = vpack.c.b16 %v1083, %v1083
      %v1148 = vpack.c.b16 %v1084, %v1084
      %v1149 = vpack.c.b16 %v1085, %v1085
      %v1150 = vpack.c.b16 %v1086, %v1086
      %v1151 = vpack.c.b16 %v1087, %v1087
      %v1152 = vpack.c.b16 %v1088, %v1088
      %v1153 = vpack.c.b16 %v1089, %v1089
      %v1154 = vpack.c.b16 %v1090, %v1090
      %v1155 = vpack.c.b16 %v1091, %v1091
      %v1156 = vpack.c.b16 %v1092, %v1092
      %v1157 = vpack.c.b16 %v1093, %v1093
      %v1158 = vpack.c.b16 %v1094, %v1094
      %v1159 = vpack.c.b16 %v1095, %v1095
      %v1160 = vpack.c.b16 %v1096, %v1096
      %v1161 = vpack.c.b16 %v1097, %v1097
      %v1162 = vpack.c.b16 %v1098, %v1098
      %v1163 = vpack.c.b16 %v1099, %v1099
      %v1164 = vpack.c.b16 %v1100, %v1100
      %v1165 = vpack.c.b16 %v1101, %v1101
      %v1166 = vpack.c.b16 %v1102, %v1102
      %v1167 = vpack.c.b16 %v1103, %v1103
      %v1168 = vpack.c.b16 %v1104, %v1104
      %v1169 = vpack.c.b16 %v1105, %v1105
      %v1170 = vpack.c.b16 %v1106, %v1106
      %v1171 = vpack.c.b16 %v1107, %v1107
      %v1172 = vpack.c.b16 %v1108, %v1108
      %vm1237 = vcmask 60416
      %1238 = vst.msk [vmem:[#allocation8] sm:$0xf] %vm1237, %v1109
      %1239 = vst.msk [vmem:[#allocation8 + $0x4] sm:$0xf] %vm1237, %v1110
      %1240 = vst.msk [vmem:[#allocation8 + $0x8] sm:$0xf] %vm1237, %v1111
      %1241 = vst.msk [vmem:[#allocation8 + $0xc] sm:$0xf] %vm1237, %v1112
      %1242 = vst.msk [vmem:[#allocation8 + $0x10] sm:$0xf] %vm1237, %v1113
      %1243 = vst.msk [vmem:[#allocation8 + $0x14] sm:$0xf] %vm1237, %v1114
      %1244 = vst.msk [vmem:[#allocation8 + $0x18] sm:$0xf] %vm1237, %v1115
      %1245 = vst.msk [vmem:[#allocation8 + $0x1c] sm:$0xf] %vm1237, %v1116
      %1246 = vst.msk [vmem:[#allocation8 + $0x20] sm:$0xf] %vm1237, %v1117
      %1247 = vst.msk [vmem:[#allocation8 + $0x24] sm:$0xf] %vm1237, %v1118
      %1248 = vst.msk [vmem:[#allocation8 + $0x28] sm:$0xf] %vm1237, %v1119
      %1249 = vst.msk [vmem:[#allocation8 + $0x2c] sm:$0xf] %vm1237, %v1120
      %1250 = vst.msk [vmem:[#allocation8 + $0x30] sm:$0xf] %vm1237, %v1121
      %1251 = vst.msk [vmem:[#allocation8 + $0x34] sm:$0xf] %vm1237, %v1122
      %1252 = vst.msk [vmem:[#allocation8 + $0x38] sm:$0xf] %vm1237, %v1123
      %1253 = vst.msk [vmem:[#allocation8 + $0x3c] sm:$0xf] %vm1237, %v1124
      %1254 = vst.msk [vmem:[#allocation8 + $0x40] sm:$0xf] %vm1237, %v1125
      %1255 = vst.msk [vmem:[#allocation8 + $0x44] sm:$0xf] %vm1237, %v1126
      %1256 = vst.msk [vmem:[#allocation8 + $0x48] sm:$0xf] %vm1237, %v1127
      %1257 = vst.msk [vmem:[#allocation8 + $0x4c] sm:$0xf] %vm1237, %v1128
      %1258 = vst.msk [vmem:[#allocation8 + $0x50] sm:$0xf] %vm1237, %v1129
      %1259 = vst.msk [vmem:[#allocation8 + $0x54] sm:$0xf] %vm1237, %v1130
      %1260 = vst.msk [vmem:[#allocation8 + $0x58] sm:$0xf] %vm1237, %v1131
      %1261 = vst.msk [vmem:[#allocation8 + $0x5c] sm:$0xf] %vm1237, %v1132
      %1262 = vst.msk [vmem:[#allocation8 + $0x60] sm:$0xf] %vm1237, %v1133
      %1263 = vst.msk [vmem:[#allocation8 + $0x64] sm:$0xf] %vm1237, %v1134
      %1264 = vst.msk [vmem:[#allocation8 + $0x68] sm:$0xf] %vm1237, %v1135
      %1265 = vst.msk [vmem:[#allocation8 + $0x6c] sm:$0xf] %vm1237, %v1136
      %1266 = vst.msk [vmem:[#allocation8 + $0x70] sm:$0xf] %vm1237, %v1137
      %1267 = vst.msk [vmem:[#allocation8 + $0x74] sm:$0xf] %vm1237, %v1138
      %1268 = vst.msk [vmem:[#allocation8 + $0x78] sm:$0xf] %vm1237, %v1139
      %1269 = vst.msk [vmem:[#allocation8 + $0x7c] sm:$0xf] %vm1237, %v1140
      %1270 = vst.msk [vmem:[#allocation8 + $0x80] sm:$0xf] %vm1237, %v1141
      %1271 = vst.msk [vmem:[#allocation8 + $0x84] sm:$0xf] %vm1237, %v1142
      %1272 = vst.msk [vmem:[#allocation8 + $0x88] sm:$0xf] %vm1237, %v1143
      %1273 = vst.msk [vmem:[#allocation8 + $0x8c] sm:$0xf] %vm1237, %v1144
      %1274 = vst.msk [vmem:[#allocation8 + $0x90] sm:$0xf] %vm1237, %v1145
      %1275 = vst.msk [vmem:[#allocation8 + $0x94] sm:$0xf] %vm1237, %v1146
      %1276 = vst.msk [vmem:[#allocation8 + $0x98] sm:$0xf] %vm1237, %v1147
      %1277 = vst.msk [vmem:[#allocation8 + $0x9c] sm:$0xf] %vm1237, %v1148
      %1278 = vst.msk [vmem:[#allocation8 + $0xa0] sm:$0xf] %vm1237, %v1149
      %1279 = vst.msk [vmem:[#allocation8 + $0xa4] sm:$0xf] %vm1237, %v1150
      %1280 = vst.msk [vmem:[#allocation8 + $0xa8] sm:$0xf] %vm1237, %v1151
      %1281 = vst.msk [vmem:[#allocation8 + $0xac] sm:$0xf] %vm1237, %v1152
      %1282 = vst.msk [vmem:[#allocation8 + $0xb0] sm:$0xf] %vm1237, %v1153
      %1283 = vst.msk [vmem:[#allocation8 + $0xb4] sm:$0xf] %vm1237, %v1154
      %1284 = vst.msk [vmem:[#allocation8 + $0xb8] sm:$0xf] %vm1237, %v1155
      %1285 = vst.msk [vmem:[#allocation8 + $0xbc] sm:$0xf] %vm1237, %v1156
      %1286 = vst.msk [vmem:[#allocation8 + $0xc0] sm:$0xf] %vm1237, %v1157
      %1287 = vst.msk [vmem:[#allocation8 + $0xc4] sm:$0xf] %vm1237, %v1158
      %1288 = vst.msk [vmem:[#allocation8 + $0xc8] sm:$0xf] %vm1237, %v1159
      %1289 = vst.msk [vmem:[#allocation8 + $0xcc] sm:$0xf] %vm1237, %v1160
      %1290 = vst.msk [vmem:[#allocation8 + $0xd0] sm:$0xf] %vm1237, %v1161
      %1291 = vst.msk [vmem:[#allocation8 + $0xd4] sm:$0xf] %vm1237, %v1162
      %1292 = vst.msk [vmem:[#allocation8 + $0xd8] sm:$0xf] %vm1237, %v1163
      %1293 = vst.msk [vmem:[#allocation8 + $0xdc] sm:$0xf] %vm1237, %v1164
      %1294 = vst.msk [vmem:[#allocation8 + $0xe0] sm:$0xf] %vm1237, %v1165
      %1295 = vst.msk [vmem:[#allocation8 + $0xe4] sm:$0xf] %vm1237, %v1166
      %1296 = vst.msk [vmem:[#allocation8 + $0xe8] sm:$0xf] %vm1237, %v1167
      %1297 = vst.msk [vmem:[#allocation8 + $0xec] sm:$0xf] %vm1237, %v1168
      %1298 = vst.msk [vmem:[#allocation8 + $0xf0] sm:$0xf] %vm1237, %v1169
      %1299 = vst.msk [vmem:[#allocation8 + $0xf4] sm:$0xf] %vm1237, %v1170
      %1300 = vst.msk [vmem:[#allocation8 + $0xf8] sm:$0xf] %vm1237, %v1171
      %1301 = vst.msk [vmem:[#allocation8 + $0xfc] sm:$0xf] %vm1237, %v1172
      %vm1302 = vcmask 64512
      %v1303 = vsel %vm1302, %v917, 0.0
      %v1304 = vsel %vm1302, %v918, 0.0
      %v1305 = vadd.f32 %v1303, %v1304
      %v1306 = vsel %vm1302, %v919, 0.0
      %v1307 = vadd.f32 %v1305, %v1306
      %v1308 = vsel %vm1302, %v920, 0.0
      %v1309 = vadd.f32 %v1307, %v1308
      %v1310 = vsel %vm1302, %v921, 0.0
      %v1311 = vadd.f32 %v1309, %v1310
      %v1312 = vsel %vm1302, %v922, 0.0
      %v1313 = vadd.f32 %v1311, %v1312
      %v1314 = vsel %vm1302, %v923, 0.0
      %v1315 = vadd.f32 %v1313, %v1314
      %v1316 = vsel %vm1302, %v924, 0.0
      %v1317 = vadd.f32 %v1315, %v1316
      %v1318 = vsel %vm1302, %v925, 0.0
      %v1319 = vadd.f32 %v1317, %v1318
      %v1320 = vsel %vm1302, %v926, 0.0
      %v1321 = vadd.f32 %v1319, %v1320
      %v1322 = vsel %vm1302, %v927, 0.0
      %v1323 = vadd.f32 %v1321, %v1322
      %v1324 = vsel %vm1302, %v928, 0.0
      %v1325 = vadd.f32 %v1323, %v1324
      %v1326 = vsel %vm1302, %v929, 0.0
      %v1327 = vadd.f32 %v1325, %v1326
      %v1328 = vsel %vm1302, %v930, 0.0
      %v1329 = vadd.f32 %v1327, %v1328
      %v1330 = vsel %vm1302, %v931, 0.0
      %v1331 = vadd.f32 %v1329, %v1330
      %v1332 = vsel %vm1302, %v932, 0.0
      %v1333 = vadd.f32 %v1331, %v1332
      %v1334 = vsel %vm1302, %v933, 0.0
      %v1335 = vadd.f32 %v1333, %v1334
      %v1336 = vsel %vm1302, %v934, 0.0
      %v1337 = vadd.f32 %v1335, %v1336
      %v1338 = vsel %vm1302, %v935, 0.0
      %v1339 = vadd.f32 %v1337, %v1338
      %v1340 = vsel %vm1302, %v936, 0.0
      %v1341 = vadd.f32 %v1339, %v1340
      %v1342 = vsel %vm1302, %v937, 0.0
      %v1343 = vadd.f32 %v1341, %v1342
      %v1344 = vsel %vm1302, %v938, 0.0
      %v1345 = vadd.f32 %v1343, %v1344
      %v1346 = vsel %vm1302, %v939, 0.0
      %v1347 = vadd.f32 %v1345, %v1346
      %v1348 = vsel %vm1302, %v940, 0.0
      %v1349 = vadd.f32 %v1347, %v1348
      %v1350 = vsel %vm1302, %v941, 0.0
      %v1351 = vadd.f32 %v1349, %v1350
      %v1352 = vsel %vm1302, %v942, 0.0
      %v1353 = vadd.f32 %v1351, %v1352
      %v1354 = vsel %vm1302, %v943, 0.0
      %v1355 = vadd.f32 %v1353, %v1354
      %v1356 = vsel %vm1302, %v944, 0.0
      %v1357 = vadd.f32 %v1355, %v1356
      %v1358 = vsel %vm1302, %v945, 0.0
      %v1359 = vadd.f32 %v1357, %v1358
      %v1360 = vsel %vm1302, %v946, 0.0
      %v1361 = vadd.f32 %v1359, %v1360
      %v1362 = vsel %vm1302, %v947, 0.0
      %v1363 = vadd.f32 %v1361, %v1362
      %v1364 = vsel %vm1302, %v948, 0.0
      %v1365 = vadd.f32 %v1363, %v1364
      %v1366 = vsel %vm1302, %v949, 0.0
      %v1367 = vadd.f32 %v1365, %v1366
      %v1368 = vsel %vm1302, %v950, 0.0
      %v1369 = vadd.f32 %v1367, %v1368
      %v1370 = vsel %vm1302, %v951, 0.0
      %v1371 = vadd.f32 %v1369, %v1370
      %v1372 = vsel %vm1302, %v952, 0.0
      %v1373 = vadd.f32 %v1371, %v1372
      %v1374 = vsel %vm1302, %v953, 0.0
      %v1375 = vadd.f32 %v1373, %v1374
      %v1376 = vsel %vm1302, %v954, 0.0
      %v1377 = vadd.f32 %v1375, %v1376
      %v1378 = vsel %vm1302, %v955, 0.0
      %v1379 = vadd.f32 %v1377, %v1378
      %v1380 = vsel %vm1302, %v956, 0.0
      %v1381 = vadd.f32 %v1379, %v1380
      %v1382 = vsel %vm1302, %v957, 0.0
      %v1383 = vadd.f32 %v1381, %v1382
      %v1384 = vsel %vm1302, %v958, 0.0
      %v1385 = vadd.f32 %v1383, %v1384
      %v1386 = vsel %vm1302, %v959, 0.0
      %v1387 = vadd.f32 %v1385, %v1386
      %v1388 = vsel %vm1302, %v960, 0.0
      %v1389 = vadd.f32 %v1387, %v1388
      %v1390 = vsel %vm1302, %v961, 0.0
      %v1391 = vadd.f32 %v1389, %v1390
      %v1392 = vsel %vm1302, %v962, 0.0
      %v1393 = vadd.f32 %v1391, %v1392
      %v1394 = vsel %vm1302, %v963, 0.0
      %v1395 = vadd.f32 %v1393, %v1394
      %v1396 = vsel %vm1302, %v964, 0.0
      %v1397 = vadd.f32 %v1395, %v1396
      %v1398 = vsel %vm1302, %v965, 0.0
      %v1399 = vadd.f32 %v1397, %v1398
      %v1400 = vsel %vm1302, %v966, 0.0
      %v1401 = vadd.f32 %v1399, %v1400
      %v1402 = vsel %vm1302, %v967, 0.0
      %v1403 = vadd.f32 %v1401, %v1402
      %v1404 = vsel %vm1302, %v968, 0.0
      %v1405 = vadd.f32 %v1403, %v1404
      %v1406 = vsel %vm1302, %v969, 0.0
      %v1407 = vadd.f32 %v1405, %v1406
      %v1408 = vsel %vm1302, %v970, 0.0
      %v1409 = vadd.f32 %v1407, %v1408
      %v1410 = vsel %vm1302, %v971, 0.0
      %v1411 = vadd.f32 %v1409, %v1410
      %v1412 = vsel %vm1302, %v972, 0.0
      %v1413 = vadd.f32 %v1411, %v1412
      %v1414 = vsel %vm1302, %v973, 0.0
      %v1415 = vadd.f32 %v1413, %v1414
      %v1416 = vsel %vm1302, %v974, 0.0
      %v1417 = vadd.f32 %v1415, %v1416
      %v1418 = vsel %vm1302, %v975, 0.0
      %v1419 = vadd.f32 %v1417, %v1418
      %v1420 = vsel %vm1302, %v976, 0.0
      %v1421 = vadd.f32 %v1419, %v1420
      %v1422 = vsel %vm1302, %v977, 0.0
      %v1423 = vadd.f32 %v1421, %v1422
      %v1424 = vsel %vm1302, %v978, 0.0
      %v1425 = vadd.f32 %v1423, %v1424
      %v1426 = vsel %vm1302, %v979, 0.0
      %v1427 = vadd.f32 %v1425, %v1426
      %v1428 = vsel %vm1302, %v980, 0.0
      %v1429 = vadd.f32 %v1427, %v1428
      %v1430 = vrot.slane %v1429, 4
      %v1431 = vadd.f32 %v1429, %v1430
      %v1432 = vrot.slane %v1431, 2
      %v1433 = vadd.f32 %v1431, %v1432
      %v1434 = vrot.slane %v1433, 1
      %v1435 = vadd.f32 %v1433, %v1434
      %vm1436 = vcmask 57344
      %1437 = vst.msk [vmem:[#allocation9] sm:$0x1] %vm1436, %v1435
      %v1438 = vmul.f32 %v917, %v917
      %v1439 = vmul.f32 %v918, %v918
      %v1440 = vmul.f32 %v919, %v919
      %v1441 = vmul.f32 %v920, %v920
      %v1442 = vmul.f32 %v921, %v921
      %v1443 = vmul.f32 %v922, %v922
      %v1444 = vmul.f32 %v923, %v923
      %v1445 = vmul.f32 %v924, %v924
      %v1446 = vmul.f32 %v925, %v925
      %v1447 = vmul.f32 %v926, %v926
      %v1448 = vmul.f32 %v927, %v927
      %v1449 = vmul.f32 %v928, %v928
      %v1450 = vmul.f32 %v929, %v929
      %v1451 = vmul.f32 %v930, %v930
      %v1452 = vmul.f32 %v931, %v931
      %v1453 = vmul.f32 %v932, %v932
      %v1454 = vmul.f32 %v933, %v933
      %v1455 = vmul.f32 %v934, %v934
      %v1456 = vmul.f32 %v935, %v935
      %v1457 = vmul.f32 %v936, %v936
      %v1458 = vmul.f32 %v937, %v937
      %v1459 = vmul.f32 %v938, %v938
      %v1460 = vmul.f32 %v939, %v939
      %v1461 = vmul.f32 %v940, %v940
      %v1462 = vmul.f32 %v941, %v941
      %v1463 = vmul.f32 %v942, %v942
      %v1464 = vmul.f32 %v943, %v943
      %v1465 = vmul.f32 %v944, %v944
      %v1466 = vmul.f32 %v945, %v945
      %v1467 = vmul.f32 %v946, %v946
      %v1468 = vmul.f32 %v947, %v947
      %v1469 = vmul.f32 %v948, %v948
      %v1470 = vmul.f32 %v949, %v949
      %v1471 = vmul.f32 %v950, %v950
      %v1472 = vmul.f32 %v951, %v951
      %v1473 = vmul.f32 %v952, %v952
      %v1474 = vmul.f32 %v953, %v953
      %v1475 = vmul.f32 %v954, %v954
      %v1476 = vmul.f32 %v955, %v955
      %v1477 = vmul.f32 %v956, %v956
      %v1478 = vmul.f32 %v957, %v957
      %v1479 = vmul.f32 %v958, %v958
      %v1480 = vmul.f32 %v959, %v959
      %v1481 = vmul.f32 %v960, %v960
      %v1482 = vmul.f32 %v961, %v961
      %v1483 = vmul.f32 %v962, %v962
      %v1484 = vmul.f32 %v963, %v963
      %v1485 = vmul.f32 %v964, %v964
      %v1486 = vmul.f32 %v965, %v965
      %v1487 = vmul.f32 %v966, %v966
      %v1488 = vmul.f32 %v967, %v967
      %v1489 = vmul.f32 %v968, %v968
      %v1490 = vmul.f32 %v969, %v969
      %v1491 = vmul.f32 %v970, %v970
      %v1492 = vmul.f32 %v971, %v971
      %v1493 = vmul.f32 %v972, %v972
      %v1494 = vmul.f32 %v973, %v973
      %v1495 = vmul.f32 %v974, %v974
      %v1496 = vmul.f32 %v975, %v975
      %v1497 = vmul.f32 %v976, %v976
      %v1498 = vmul.f32 %v977, %v977
      %v1499 = vmul.f32 %v978, %v978
      %v1500 = vmul.f32 %v979, %v979
      %v1501 = vmul.f32 %v980, %v980
      %v1502 = vsel %vm1302, %v1438, 0.0
      %v1503 = vsel %vm1302, %v1439, 0.0
      %v1504 = vadd.f32 %v1502, %v1503
      %v1505 = vsel %vm1302, %v1440, 0.0
      %v1506 = vadd.f32 %v1504, %v1505
      %v1507 = vsel %vm1302, %v1441, 0.0
      %v1508 = vadd.f32 %v1506, %v1507
      %v1509 = vsel %vm1302, %v1442, 0.0
      %v1510 = vadd.f32 %v1508, %v1509
      %v1511 = vsel %vm1302, %v1443, 0.0
      %v1512 = vadd.f32 %v1510, %v1511
      %v1513 = vsel %vm1302, %v1444, 0.0
      %v1514 = vadd.f32 %v1512, %v1513
      %v1515 = vsel %vm1302, %v1445, 0.0
      %v1516 = vadd.f32 %v1514, %v1515
      %v1517 = vsel %vm1302, %v1446, 0.0
      %v1518 = vadd.f32 %v1516, %v1517
      %v1519 = vsel %vm1302, %v1447, 0.0
      %v1520 = vadd.f32 %v1518, %v1519
      %v1521 = vsel %vm1302, %v1448, 0.0
      %v1522 = vadd.f32 %v1520, %v1521
      %v1523 = vsel %vm1302, %v1449, 0.0
      %v1524 = vadd.f32 %v1522, %v1523
      %v1525 = vsel %vm1302, %v1450, 0.0
      %v1526 = vadd.f32 %v1524, %v1525
      %v1527 = vsel %vm1302, %v1451, 0.0
      %v1528 = vadd.f32 %v1526, %v1527
      %v1529 = vsel %vm1302, %v1452, 0.0
      %v1530 = vadd.f32 %v1528, %v1529
      %v1531 = vsel %vm1302, %v1453, 0.0
      %v1532 = vadd.f32 %v1530, %v1531
      %v1533 = vsel %vm1302, %v1454, 0.0
      %v1534 = vadd.f32 %v1532, %v1533
      %v1535 = vsel %vm1302, %v1455, 0.0
      %v1536 = vadd.f32 %v1534, %v1535
      %v1537 = vsel %vm1302, %v1456, 0.0
      %v1538 = vadd.f32 %v1536, %v1537
      %v1539 = vsel %vm1302, %v1457, 0.0
      %v1540 = vadd.f32 %v1538, %v1539
      %v1541 = vsel %vm1302, %v1458, 0.0
      %v1542 = vadd.f32 %v1540, %v1541
      %v1543 = vsel %vm1302, %v1459, 0.0
      %v1544 = vadd.f32 %v1542, %v1543
      %v1545 = vsel %vm1302, %v1460, 0.0
      %v1546 = vadd.f32 %v1544, %v1545
      %v1547 = vsel %vm1302, %v1461, 0.0
      %v1548 = vadd.f32 %v1546, %v1547
      %v1549 = vsel %vm1302, %v1462, 0.0
      %v1550 = vadd.f32 %v1548, %v1549
      %v1551 = vsel %vm1302, %v1463, 0.0
      %v1552 = vadd.f32 %v1550, %v1551
      %v1553 = vsel %vm1302, %v1464, 0.0
      %v1554 = vadd.f32 %v1552, %v1553
      %v1555 = vsel %vm1302, %v1465, 0.0
      %v1556 = vadd.f32 %v1554, %v1555
      %v1557 = vsel %vm1302, %v1466, 0.0
      %v1558 = vadd.f32 %v1556, %v1557
      %v1559 = vsel %vm1302, %v1467, 0.0
      %v1560 = vadd.f32 %v1558, %v1559
      %v1561 = vsel %vm1302, %v1468, 0.0
      %v1562 = vadd.f32 %v1560, %v1561
      %v1563 = vsel %vm1302, %v1469, 0.0
      %v1564 = vadd.f32 %v1562, %v1563
      %v1565 = vsel %vm1302, %v1470, 0.0
      %v1566 = vadd.f32 %v1564, %v1565
      %v1567 = vsel %vm1302, %v1471, 0.0
      %v1568 = vadd.f32 %v1566, %v1567
      %v1569 = vsel %vm1302, %v1472, 0.0
      %v1570 = vadd.f32 %v1568, %v1569
      %v1571 = vsel %vm1302, %v1473, 0.0
      %v1572 = vadd.f32 %v1570, %v1571
      %v1573 = vsel %vm1302, %v1474, 0.0
      %v1574 = vadd.f32 %v1572, %v1573
      %v1575 = vsel %vm1302, %v1475, 0.0
      %v1576 = vadd.f32 %v1574, %v1575
      %v1577 = vsel %vm1302, %v1476, 0.0
      %v1578 = vadd.f32 %v1576, %v1577
      %v1579 = vsel %vm1302, %v1477, 0.0
      %v1580 = vadd.f32 %v1578, %v1579
      %v1581 = vsel %vm1302, %v1478, 0.0
      %v1582 = vadd.f32 %v1580, %v1581
      %v1583 = vsel %vm1302, %v1479, 0.0
      %v1584 = vadd.f32 %v1582, %v1583
      %v1585 = vsel %vm1302, %v1480, 0.0
      %v1586 = vadd.f32 %v1584, %v1585
      %v1587 = vsel %vm1302, %v1481, 0.0
      %v1588 = vadd.f32 %v1586, %v1587
      %v1589 = vsel %vm1302, %v1482, 0.0
      %v1590 = vadd.f32 %v1588, %v1589
      %v1591 = vsel %vm1302, %v1483, 0.0
      %v1592 = vadd.f32 %v1590, %v1591
      %v1593 = vsel %vm1302, %v1484, 0.0
      %v1594 = vadd.f32 %v1592, %v1593
      %v1595 = vsel %vm1302, %v1485, 0.0
      %v1596 = vadd.f32 %v1594, %v1595
      %v1597 = vsel %vm1302, %v1486, 0.0
      %v1598 = vadd.f32 %v1596, %v1597
      %v1599 = vsel %vm1302, %v1487, 0.0
      %v1600 = vadd.f32 %v1598, %v1599
      %v1601 = vsel %vm1302, %v1488, 0.0
      %v1602 = vadd.f32 %v1600, %v1601
      %v1603 = vsel %vm1302, %v1489, 0.0
      %v1604 = vadd.f32 %v1602, %v1603
      %v1605 = vsel %vm1302, %v1490, 0.0
      %v1606 = vadd.f32 %v1604, %v1605
      %v1607 = vsel %vm1302, %v1491, 0.0
      %v1608 = vadd.f32 %v1606, %v1607
      %v1609 = vsel %vm1302, %v1492, 0.0
      %v1610 = vadd.f32 %v1608, %v1609
      %v1611 = vsel %vm1302, %v1493, 0.0
      %v1612 = vadd.f32 %v1610, %v1611
      %v1613 = vsel %vm1302, %v1494, 0.0
      %v1614 = vadd.f32 %v1612, %v1613
      %v1615 = vsel %vm1302, %v1495, 0.0
      %v1616 = vadd.f32 %v1614, %v1615
      %v1617 = vsel %vm1302, %v1496, 0.0
      %v1618 = vadd.f32 %v1616, %v1617
      %v1619 = vsel %vm1302, %v1497, 0.0
      %v1620 = vadd.f32 %v1618, %v1619
      %v1621 = vsel %vm1302, %v1498, 0.0
      %v1622 = vadd.f32 %v1620, %v1621
      %v1623 = vsel %vm1302, %v1499, 0.0
      %v1624 = vadd.f32 %v1622, %v1623
      %v1625 = vsel %vm1302, %v1500, 0.0
      %v1626 = vadd.f32 %v1624, %v1625
      %v1627 = vsel %vm1302, %v1501, 0.0
      %v1628 = vadd.f32 %v1626, %v1627
      %v1629 = vrot.slane %v1628, 4
      %v1630 = vadd.f32 %v1628, %v1629
      %v1631 = vrot.slane %v1630, 2
      %v1632 = vadd.f32 %v1630, %v1631
      %v1633 = vrot.slane %v1632, 1
      %v1634 = vadd.f32 %v1632, %v1633
      %1635 = vst.msk [vmem:[#allocation11] sm:$0x1] %vm1436, %v1634
    $region25: #{tpu_custom_call.1} parent=1 // pred_fallthru
      _
    // Predicated region
    $region26: #{tpu_custom_call.1} parent=1 // pred_check
      _
    $region27: #{tpu_custom_call.1} parent=1 // pred_check_branch
      %1637 = sbr.rel (0) target = $region29
    $region28: #{tpu_custom_call.1} parent=1 // pred_region
      %s1639 = ssub.s32 4096, 4096
      %1640 = vsyncadd [#allocation5], %s1639
      %s1641 = sshll.u32 [#allocation8], 4
      %s1642 = int_to_ptr.vmem [resolvable:$true] %s1641
      %1647 = dma.vmem_to_hbm [thread:$0]  %s1642, 4096, %s2, [#allocation5], 64, 64, 4
    $region29: #{tpu_custom_call.1} parent=1 // pred_fallthru
      _
    // Predicated region
    $region30: #{tpu_custom_call.1} parent=1 // pred_check
      _
    $region31: #{tpu_custom_call.1} parent=1 // pred_check_branch
      %1649 = sbr.rel (0) target = $region33
    $region32: #{tpu_custom_call.1} parent=1 // pred_region
      %s1651 = ssub.s32 16, 16
      %1652 = vsyncadd [#allocation10], %s1651
      %s1654 = sshll.u32 [#allocation9], 4
      %s1655 = int_to_ptr.vmem [resolvable:$true] %s1654
      %1657 = dma.vmem_to_hbm [thread:$0]  %s1655, 16, %s3, [#allocation10]
    $region33: #{tpu_custom_call.1} parent=1 // pred_fallthru
      _
    // Predicated region
    $region34: #{tpu_custom_call.1} parent=1 // pred_check
      _
    $region35: #{tpu_custom_call.1} parent=1 // pred_check_branch
      %1659 = sbr.rel (0) target = $region37
    $region36: #{tpu_custom_call.1} parent=1 // pred_region
      %s1661 = ssub.s32 16, 16
      %1662 = vsyncadd [#allocation10], %s1661
      %s1664 = sshll.u32 [#allocation11], 4
      %s1665 = int_to_ptr.vmem [resolvable:$true] %s1664
      %1667 = dma.vmem_to_hbm [thread:$0]  %s1665, 16, %s4, [#allocation10]
    $region37: #{tpu_custom_call.1} parent=1 // pred_fallthru
      _
    // Predicated region
    $region38: #{tpu_custom_call.1} parent=1 // pred_check
      _
    $region39: #{tpu_custom_call.1} parent=1 // pred_check_branch
      %1669 = sbr.rel (0) target = $region41
    $region40: #{tpu_custom_call.1} parent=1 // pred_region
      %1670 = dma.done [#allocation5], 4096
    $region41: #{tpu_custom_call.1} parent=1 // pred_fallthru
      _
    // Predicated region
    $region42: #{tpu_custom_call.1} parent=1 // pred_check
      _
    $region43: #{tpu_custom_call.1} parent=1 // pred_check_branch
      %1672 = sbr.rel (0) target = $region45
    $region44: #{tpu_custom_call.1} parent=1 // pred_region
      %1673 = dma.done [#allocation10], 16
    $region45: #{tpu_custom_call.1} parent=1 // pred_fallthru
      _
    // Predicated region
    $region46: #{tpu_custom_call.1} parent=1 // pred_check
      _
    $region47: #{tpu_custom_call.1} parent=1 // pred_check_branch
      %1675 = sbr.rel (0) target = $region49
    $region48: #{tpu_custom_call.1} parent=1 // pred_region
      %1676 = dma.done [#allocation10], 16
    $region49: #{tpu_custom_call.1} parent=1 // pred_fallthru
      _
    %1677 = vsyncpa [#allocation4], 1
    %1678 = vsyncpa [#allocation7], 1
    %1679 = vsyncpa [#allocation5], 1
    %1680 = vsyncpa [#allocation10], 1

</llo_original>
